<compile_context>
chip_gen: v7x
topology: tpu7x:2x2x1
jax: 0.10.0
libtpu: 0.0.40
codegen_flags: <defaults>
</compile_context>

<pallas_src>
import functools

import jax
import jax.numpy as jnp
from jax.experimental import pallas as pl
from jax.experimental.pallas import tpu as pltpu


def transformer_block_kernel(
    x_ref,       # (M, K)       bf16   M = block_b * T
    wqkv_ref,    # (K, 3*H*K)   bf16   [wq*K^-0.5 | wk | wv*K^-0.25]
    wu_ref,      # (H*K, K)     bf16
    w1_ref,      # (K, 4K)      bf16
    w2_ref,      # (4K, K)      bf16
    vec_ref,     # (6, K)       f32    rows: bu, g1, be1, b2, g2, be2
    b1_ref,      # (1, 4K)      f32
    o_ref,       # (M, K)       bf16
    *, block_b, seq, heads, k, eps):
    m = block_b * seq
    hk = heads * k

    x_bf = x_ref[...]                           # bf16 MXU operand
    x_f32 = x_bf.astype(jnp.float32)            # residual path stays f32

    # ---- fused QKV projection: one MXU pass over N = 3*H*K columns ----
    qkv = jnp.dot(x_bf, wqkv_ref[...], preferred_element_type=jnp.float32)   # (M, 3HK)
    qkv3 = qkv.reshape(block_b, seq, 3 * hk)    # split leading dim only (safe relayout)

    bu, g1, be1 = vec_ref[0:1, :], vec_ref[1:2, :], vec_ref[2:3, :]
    b2, g2, be2 = vec_ref[3:4, :], vec_ref[4:5, :], vec_ref[5:6, :]

    # ---- per-head attention; the unify contraction is hoisted out of the loop ----
    head_outs = []
    for hd in range(heads):                     # heads is small & static (unrolled)
        q_h = qkv3[:, :, hd * k:(hd + 1) * k].astype(jnp.bfloat16)            # (b,T,k)
        k_h = qkv3[:, :, hk + hd * k:hk + (hd + 1) * k].astype(jnp.bfloat16)
        v_h = qkv3[:, :, 2 * hk + hd * k:2 * hk + (hd + 1) * k].astype(jnp.bfloat16)
        # scores; the 1/sqrt(k) scale is already folded into wq
        s = jnp.einsum("btk,bsk->bts", q_h, k_h,
                       preferred_element_type=jnp.float32)                    # (b,T,T) f32
        s = s - jnp.max(s, axis=-1, keepdims=True)
        p = jnp.exp(s)
        p = p * pl.reciprocal(jnp.sum(p, axis=-1, keepdims=True), approx=True)
        o_h = jnp.einsum("bts,bsk->btk", p.astype(jnp.bfloat16), v_h,
                         preferred_element_type=jnp.float32)                  # (b,T,k) f32
        head_outs.append(o_h)

    # ---- single unify matmul: contraction depth H*K = 128 (vs 4 x depth-32) ----
    att_in = jnp.concatenate(head_outs, axis=-1).reshape(m, hk).astype(jnp.bfloat16)
    att = jnp.dot(att_in, wu_ref[...], preferred_element_type=jnp.float32) + bu   # (M, K)

    # ---- residual + LayerNorm1 (f32) ----
    y = att + x_f32
    mu = jnp.mean(y, axis=-1, keepdims=True)
    var = jnp.mean(jnp.square(y - mu), axis=-1, keepdims=True)
    y = (y - mu) * jax.lax.rsqrt(var + eps) * g1 + be1

    # ---- feed-forward (bf16 MXU operands, f32 accumulate) ----
    h1 = jnp.dot(y.astype(jnp.bfloat16), w1_ref[...],
                 preferred_element_type=jnp.float32) + b1_ref[...]
    h1 = jnp.maximum(h1, 0.0)
    ff = jnp.dot(h1.astype(jnp.bfloat16), w2_ref[...],
                 preferred_element_type=jnp.float32) + b2

    # ---- residual + LayerNorm2 (f32) ----
    z = ff + y
    mu2 = jnp.mean(z, axis=-1, keepdims=True)
    var2 = jnp.mean(jnp.square(z - mu2), axis=-1, keepdims=True)
    o_ref[...] = ((z - mu2) * jax.lax.rsqrt(var2 + eps) * g2 + be2).astype(o_ref.dtype)


def _pick_block_b(B, T):
    """Rows per grid step: target ~512, prefer >= 2 grid steps (v7x has 2 TensorCores),
    keep row blocks 16-sublane aligned (valid for f32 and bf16 tiling) unless one block
    covers the whole batch."""
    target = max(1, 512 // T)
    cands = [d for d in range(1, B + 1)
             if B % d == 0 and (d == B or (d * T) % 16 == 0)]

    def score(d):
        return (0 if B // d >= 2 else 1, abs(d - target))

    return min(cands, key=score)


def transformer_block(x, params, *, heads, eps=1e-5, block_b=None):
    B, T, K = x.shape
    if block_b is None:
        block_b = _pick_block_b(B, T)
    assert B % block_b == 0
    M = block_b * T
    grid = (B // block_b,)

    f32, bf16 = jnp.float32, jnp.bfloat16

    # Fold attention scales into the weights (free) and fuse Q/K/V into one matmul weight.
    wqkv = jnp.concatenate(
        [params["wq"] * (K ** -0.5), params["wk"], params["wv"] * (K ** -0.25)],
        axis=1).astype(bf16)                                  # (K, 3*H*K)
    wu = params["wu"].astype(bf16)                            # (H*K, K)
    w1 = params["w1"].astype(bf16)                            # (K, 4K)
    w2 = params["w2"].astype(bf16)                            # (4K, K)
    # Pack the six K-wide bias/gain vectors into one array (one BlockSpec stream).
    vecs = jnp.concatenate(
        [params["bu"], params["g1"], params["be1"],
         params["b2"], params["g2"], params["be2"]], axis=0).astype(f32)   # (6, K)
    b1 = params["b1"].astype(f32)                             # (1, 4K)

    weights = [wqkv, wu, w1, w2, vecs, b1]

    def const_spec(shape):
        # constant index_map -> block re-used across grid steps (DMA'd once, VMEM-resident)
        return pl.BlockSpec(shape, lambda *_, _n=len(shape): (0,) * _n)

    kernel = functools.partial(transformer_block_kernel, block_b=block_b,
                               seq=T, heads=heads, k=K, eps=eps)

    # bf16 activation I/O: halves the only per-step HBM traffic (x read + out write).
    x2 = x.reshape(B * T, K).astype(bf16)

    out = pl.pallas_call(
        kernel,
        out_shape=jax.ShapeDtypeStruct((B * T, K), bf16),
        grid=grid,
        in_specs=[pl.BlockSpec((M, K), lambda i: (i, 0))]
        + [const_spec(w.shape) for w in weights],
        out_specs=pl.BlockSpec((M, K), lambda i: (i, 0)),
        compiler_params=pltpu.CompilerParams(
            dimension_semantics=("parallel",),
            vmem_limit_bytes=64 * 1024 * 1024),
    )(x2, *weights)
    return out.reshape(B, T, K).astype(x.dtype)


def transformer_block_ref(x, params, *, heads, eps=1e-5):
    """Pure-JAX f32 reference mirroring the PyTorch forward exactly."""
    B, T, K = x.shape
    q = x @ params["wq"]
    kk = x @ params["wk"]
    v = (x @ params["wv"]) / (K ** 0.25)
    q = q.reshape(B, T, heads, K).transpose(0, 2, 1, 3)      # (B, H, T, K)
    kk = kk.reshape(B, T, heads, K).transpose(0, 2, 1, 3)
    v = v.reshape(B, T, heads, K).transpose(0, 2, 1, 3)
    w = jnp.einsum("bhtk,bhsk->bhts", q, kk) / (K ** 0.5)
    w = jax.nn.softmax(w, axis=-1)
    out = jnp.einsum("bhts,bhsk->bhtk", w, v)
    out = out.transpose(0, 2, 1, 3).reshape(B, T, heads * K)
    att = out @ params["wu"] + params["bu"][0]

    def ln(a, g, b):
        mu = jnp.mean(a, axis=-1, keepdims=True)
        var = jnp.mean((a - mu) ** 2, axis=-1, keepdims=True)
        return (a - mu) * jax.lax.rsqrt(var + eps) * g[0] + b[0]

    y = ln(att + x, params["g1"], params["be1"])
    h1 = jnp.maximum(y @ params["w1"] + params["b1"][0], 0.0)
    ff = h1 @ params["w2"] + params["b2"][0]
    return ln(ff + y, params["g2"], params["be2"])


def init_params(key, k, heads):
    hk = heads * k
    keys = jax.random.split(key, 8)
    s = 0.05
    return {
        "wq": jax.random.normal(keys[0], (k, hk), jnp.float32) * s,
        "wk": jax.random.normal(keys[1], (k, hk), jnp.float32) * s,
        "wv": jax.random.normal(keys[2], (k, hk), jnp.float32) * s,
        "wu": jax.random.normal(keys[3], (hk, k), jnp.float32) * s,
        "bu": jax.random.normal(keys[4], (1, k), jnp.float32) * s,
        "g1": jnp.ones((1, k), jnp.float32),
        "be1": jnp.zeros((1, k), jnp.float32),
        "w1": jax.random.normal(keys[5], (k, 4 * k), jnp.float32) * s,
        "b1": jax.random.normal(keys[6], (1, 4 * k), jnp.float32) * s,
        "w2": jax.random.normal(keys[7], (4 * k, k), jnp.float32) * s,
        "b2": jnp.zeros((1, k), jnp.float32),
        "g2": jnp.ones((1, k), jnp.float32),
        "be2": jnp.zeros((1, k), jnp.float32),
    }


if __name__ == "__main__":
    B, T, K, HEADS = 2, 8, 32, 4          # heads * K = 128 (lane-aligned)
    key = jax.random.PRNGKey(0)
    kx, kp = jax.random.split(key)
    x = jax.random.normal(kx, (B, T, K), jnp.float32)
    params = init_params(kp, K, HEADS)

    out = transformer_block(x, params, heads=HEADS)
    out = jax.block_until_ready(out)

    ref = transformer_block_ref(x, params, heads=HEADS)
    assert out.shape == (B, T, K)
    # bf16 activation I/O + bf16 MXU operands (f32 accumulation) vs the f32 reference
    assert jnp.allclose(out, ref, atol=4e-2, rtol=4e-2), "mismatch vs JAX reference"

    print("KERNEL_OK")
</pallas_src>

<mosaic_0001>
module attributes {stable_mosaic.version = 11 : i64} {
  func.func @transformer_block_kernel(%arg0: i32, %arg1: memref<16x32xbf16, #tpu.memory_space<vmem>>, %arg2: memref<32x384xbf16, #tpu.memory_space<vmem>>, %arg3: memref<128x32xbf16, #tpu.memory_space<vmem>>, %arg4: memref<32x128xbf16, #tpu.memory_space<vmem>>, %arg5: memref<128x32xbf16, #tpu.memory_space<vmem>>, %arg6: memref<6x32xf32, #tpu.memory_space<vmem>>, %arg7: memref<1x128xf32, #tpu.memory_space<vmem>>, %arg8: memref<16x32xbf16, #tpu.memory_space<vmem>>) attributes {dimension_semantics = [#tpu.dimension_semantics<parallel>], iteration_bounds = array<i64: 1>, scalar_prefetch = 0 : i64, scratch_operands = 0 : i64, tpu.core_type = #tpu.core_type<tc>, window_params = [{transform_indices = @transform_0, window_bounds = array<i64: 16, 32>}, {pipeline_mode = #tpu.pipeline_mode<synchronous>, transform_indices = @transform_1, window_bounds = array<i64: 32, 384>}, {pipeline_mode = #tpu.pipeline_mode<synchronous>, transform_indices = @transform_2, window_bounds = array<i64: 128, 32>}, {pipeline_mode = #tpu.pipeline_mode<synchronous>, transform_indices = @transform_3, window_bounds = array<i64: 32, 128>}, {pipeline_mode = #tpu.pipeline_mode<synchronous>, transform_indices = @transform_4, window_bounds = array<i64: 128, 32>}, {pipeline_mode = #tpu.pipeline_mode<synchronous>, transform_indices = @transform_5, window_bounds = array<i64: 6, 32>}, {pipeline_mode = #tpu.pipeline_mode<synchronous>, transform_indices = @transform_6, window_bounds = array<i64: 1, 128>}, {transform_indices = @transform_7, window_bounds = array<i64: 16, 32>}]} {
    %c0 = arith.constant 0 : index
    %c0_0 = arith.constant 0 : index
    %0 = vector.load %arg1[%c0, %c0_0] : memref<16x32xbf16, #tpu.memory_space<vmem>>, vector<16x32xbf16>
    %1 = arith.extf %0 : vector<16x32xbf16> to vector<16x32xf32>
    %c0_1 = arith.constant 0 : index
    %c0_2 = arith.constant 0 : index
    %2 = vector.load %arg2[%c0_1, %c0_2] : memref<32x384xbf16, #tpu.memory_space<vmem>>, vector<32x384xbf16>
    %cst = arith.constant dense<0.000000e+00> : vector<16x384xf32>
    %3 = tpu.matmul %0, %2, %cst {dimension_numbers = #tpu.dot_dimension_numbers<[1], [0], [0], [1], [0, 0, 1, 1], [], []>} : vector<16x32xbf16>, vector<32x384xbf16>, vector<16x384xf32> -> vector<16x384xf32>
    %4 = vector.shape_cast %3 : vector<16x384xf32> to vector<2x8x384xf32>
    %c0_3 = arith.constant 0 : index
    %c0_4 = arith.constant 0 : index
    %5 = vector.load %arg6[%c0_3, %c0_4] : memref<6x32xf32, #tpu.memory_space<vmem>>, vector<1x32xf32>
    %c1 = arith.constant 1 : index
    %c0_5 = arith.constant 0 : index
    %6 = vector.load %arg6[%c1, %c0_5] : memref<6x32xf32, #tpu.memory_space<vmem>>, vector<1x32xf32>
    %c2 = arith.constant 2 : index
    %c0_6 = arith.constant 0 : index
    %7 = vector.load %arg6[%c2, %c0_6] : memref<6x32xf32, #tpu.memory_space<vmem>>, vector<1x32xf32>
    %c3 = arith.constant 3 : index
    %c0_7 = arith.constant 0 : index
    %8 = vector.load %arg6[%c3, %c0_7] : memref<6x32xf32, #tpu.memory_space<vmem>>, vector<1x32xf32>
    %c4 = arith.constant 4 : index
    %c0_8 = arith.constant 0 : index
    %9 = vector.load %arg6[%c4, %c0_8] : memref<6x32xf32, #tpu.memory_space<vmem>>, vector<1x32xf32>
    %c5 = arith.constant 5 : index
    %c0_9 = arith.constant 0 : index
    %10 = vector.load %arg6[%c5, %c0_9] : memref<6x32xf32, #tpu.memory_space<vmem>>, vector<1x32xf32>
    %11 = vector.extract_strided_slice %4 {offsets = [0, 0, 0], sizes = [2, 8, 32], strides = [1, 1, 1]} : vector<2x8x384xf32> to vector<2x8x32xf32>
    %12 = arith.truncf %11 : vector<2x8x32xf32> to vector<2x8x32xbf16>
    %13 = vector.extract_strided_slice %4 {offsets = [0, 0, 128], sizes = [2, 8, 32], strides = [1, 1, 1]} : vector<2x8x384xf32> to vector<2x8x32xf32>
    %14 = arith.truncf %13 : vector<2x8x32xf32> to vector<2x8x32xbf16>
    %15 = vector.extract_strided_slice %4 {offsets = [0, 0, 256], sizes = [2, 8, 32], strides = [1, 1, 1]} : vector<2x8x384xf32> to vector<2x8x32xf32>
    %16 = arith.truncf %15 : vector<2x8x32xf32> to vector<2x8x32xbf16>
    "tpu.trace_start"() <{level = 10 : i32, message = "btk,bsk->bts"}> : () -> ()
    %cst_10 = arith.constant dense<0.000000e+00> : vector<2x8x8xf32>
    %17 = tpu.matmul %12, %14, %cst_10 {dimension_numbers = #tpu.dot_dimension_numbers<[2], [2], [1], [1], [0, 0, 0, 1, 1, 1], [0], [0]>} : vector<2x8x32xbf16>, vector<2x8x32xbf16>, vector<2x8x8xf32> -> vector<2x8x8xf32>
    "tpu.trace_stop"() : () -> ()
    %cst_11 = arith.constant dense<0xFF800000> : vector<2x8xf32>
    %18 = vector.multi_reduction <maximumf>, %17, %cst_11 [2] : vector<2x8x8xf32> to vector<2x8xf32>
    %19 = vector.shape_cast %18 : vector<2x8xf32> to vector<2x8x1xf32>
    %20 = vector.broadcast %19 : vector<2x8x1xf32> to vector<2x8x8xf32>
    %21 = arith.subf %17, %20 : vector<2x8x8xf32>
    %22 = math.exp %21 : vector<2x8x8xf32>
    %cst_12 = arith.constant dense<0.000000e+00> : vector<2x8xf32>
    %23 = vector.multi_reduction <add>, %22, %cst_12 [2] : vector<2x8x8xf32> to vector<2x8xf32>
    %24 = vector.shape_cast %23 : vector<2x8xf32> to vector<2x8x1xf32>
    %25 = tpu.reciprocal %24 {approx = true} : vector<2x8x1xf32> -> vector<2x8x1xf32>
    %26 = vector.broadcast %25 : vector<2x8x1xf32> to vector<2x8x8xf32>
    %27 = arith.mulf %22, %26 : vector<2x8x8xf32>
    %28 = arith.truncf %27 : vector<2x8x8xf32> to vector<2x8x8xbf16>
    "tpu.trace_start"() <{level = 10 : i32, message = "bts,bsk->btk"}> : () -> ()
    %cst_13 = arith.constant dense<0.000000e+00> : vector<2x8x32xf32>
    %29 = tpu.matmul %28, %16, %cst_13 {dimension_numbers = #tpu.dot_dimension_numbers<[2], [1], [1], [2], [0, 0, 0, 1, 1, 2], [0], [0]>} : vector<2x8x8xbf16>, vector<2x8x32xbf16>, vector<2x8x32xf32> -> vector<2x8x32xf32>
    "tpu.trace_stop"() : () -> ()
    %30 = vector.extract_strided_slice %4 {offsets = [0, 0, 32], sizes = [2, 8, 32], strides = [1, 1, 1]} : vector<2x8x384xf32> to vector<2x8x32xf32>
    %31 = arith.truncf %30 : vector<2x8x32xf32> to vector<2x8x32xbf16>
    %32 = vector.extract_strided_slice %4 {offsets = [0, 0, 160], sizes = [2, 8, 32], strides = [1, 1, 1]} : vector<2x8x384xf32> to vector<2x8x32xf32>
    %33 = arith.truncf %32 : vector<2x8x32xf32> to vector<2x8x32xbf16>
    %34 = vector.extract_strided_slice %4 {offsets = [0, 0, 288], sizes = [2, 8, 32], strides = [1, 1, 1]} : vector<2x8x384xf32> to vector<2x8x32xf32>
    %35 = arith.truncf %34 : vector<2x8x32xf32> to vector<2x8x32xbf16>
    "tpu.trace_start"() <{level = 10 : i32, message = "btk,bsk->bts"}> : () -> ()
    %cst_14 = arith.constant dense<0.000000e+00> : vector<2x8x8xf32>
    %36 = tpu.matmul %31, %33, %cst_14 {dimension_numbers = #tpu.dot_dimension_numbers<[2], [2], [1], [1], [0, 0, 0, 1, 1, 1], [0], [0]>} : vector<2x8x32xbf16>, vector<2x8x32xbf16>, vector<2x8x8xf32> -> vector<2x8x8xf32>
    "tpu.trace_stop"() : () -> ()
    %cst_15 = arith.constant dense<0xFF800000> : vector<2x8xf32>
    %37 = vector.multi_reduction <maximumf>, %36, %cst_15 [2] : vector<2x8x8xf32> to vector<2x8xf32>
    %38 = vector.shape_cast %37 : vector<2x8xf32> to vector<2x8x1xf32>
    %39 = vector.broadcast %38 : vector<2x8x1xf32> to vector<2x8x8xf32>
    %40 = arith.subf %36, %39 : vector<2x8x8xf32>
    %41 = math.exp %40 : vector<2x8x8xf32>
    %cst_16 = arith.constant dense<0.000000e+00> : vector<2x8xf32>
    %42 = vector.multi_reduction <add>, %41, %cst_16 [2] : vector<2x8x8xf32> to vector<2x8xf32>
    %43 = vector.shape_cast %42 : vector<2x8xf32> to vector<2x8x1xf32>
    %44 = tpu.reciprocal %43 {approx = true} : vector<2x8x1xf32> -> vector<2x8x1xf32>
    %45 = vector.broadcast %44 : vector<2x8x1xf32> to vector<2x8x8xf32>
    %46 = arith.mulf %41, %45 : vector<2x8x8xf32>
    %47 = arith.truncf %46 : vector<2x8x8xf32> to vector<2x8x8xbf16>
    "tpu.trace_start"() <{level = 10 : i32, message = "bts,bsk->btk"}> : () -> ()
    %cst_17 = arith.constant dense<0.000000e+00> : vector<2x8x32xf32>
    %48 = tpu.matmul %47, %35, %cst_17 {dimension_numbers = #tpu.dot_dimension_numbers<[2], [1], [1], [2], [0, 0, 0, 1, 1, 2], [0], [0]>} : vector<2x8x8xbf16>, vector<2x8x32xbf16>, vector<2x8x32xf32> -> vector<2x8x32xf32>
    "tpu.trace_stop"() : () -> ()
    %49 = vector.extract_strided_slice %4 {offsets = [0, 0, 64], sizes = [2, 8, 32], strides = [1, 1, 1]} : vector<2x8x384xf32> to vector<2x8x32xf32>
    %50 = arith.truncf %49 : vector<2x8x32xf32> to vector<2x8x32xbf16>
    %51 = vector.extract_strided_slice %4 {offsets = [0, 0, 192], sizes = [2, 8, 32], strides = [1, 1, 1]} : vector<2x8x384xf32> to vector<2x8x32xf32>
    %52 = arith.truncf %51 : vector<2x8x32xf32> to vector<2x8x32xbf16>
    %53 = vector.extract_strided_slice %4 {offsets = [0, 0, 320], sizes = [2, 8, 32], strides = [1, 1, 1]} : vector<2x8x384xf32> to vector<2x8x32xf32>
    %54 = arith.truncf %53 : vector<2x8x32xf32> to vector<2x8x32xbf16>
    "tpu.trace_start"() <{level = 10 : i32, message = "btk,bsk->bts"}> : () -> ()
    %cst_18 = arith.constant dense<0.000000e+00> : vector<2x8x8xf32>
    %55 = tpu.matmul %50, %52, %cst_18 {dimension_numbers = #tpu.dot_dimension_numbers<[2], [2], [1], [1], [0, 0, 0, 1, 1, 1], [0], [0]>} : vector<2x8x32xbf16>, vector<2x8x32xbf16>, vector<2x8x8xf32> -> vector<2x8x8xf32>
    "tpu.trace_stop"() : () -> ()
    %cst_19 = arith.constant dense<0xFF800000> : vector<2x8xf32>
    %56 = vector.multi_reduction <maximumf>, %55, %cst_19 [2] : vector<2x8x8xf32> to vector<2x8xf32>
    %57 = vector.shape_cast %56 : vector<2x8xf32> to vector<2x8x1xf32>
    %58 = vector.broadcast %57 : vector<2x8x1xf32> to vector<2x8x8xf32>
    %59 = arith.subf %55, %58 : vector<2x8x8xf32>
    %60 = math.exp %59 : vector<2x8x8xf32>
    %cst_20 = arith.constant dense<0.000000e+00> : vector<2x8xf32>
    %61 = vector.multi_reduction <add>, %60, %cst_20 [2] : vector<2x8x8xf32> to vector<2x8xf32>
    %62 = vector.shape_cast %61 : vector<2x8xf32> to vector<2x8x1xf32>
    %63 = tpu.reciprocal %62 {approx = true} : vector<2x8x1xf32> -> vector<2x8x1xf32>
    %64 = vector.broadcast %63 : vector<2x8x1xf32> to vector<2x8x8xf32>
    %65 = arith.mulf %60, %64 : vector<2x8x8xf32>
    %66 = arith.truncf %65 : vector<2x8x8xf32> to vector<2x8x8xbf16>
    "tpu.trace_start"() <{level = 10 : i32, message = "bts,bsk->btk"}> : () -> ()
    %cst_21 = arith.constant dense<0.000000e+00> : vector<2x8x32xf32>
    %67 = tpu.matmul %66, %54, %cst_21 {dimension_numbers = #tpu.dot_dimension_numbers<[2], [1], [1], [2], [0, 0, 0, 1, 1, 2], [0], [0]>} : vector<2x8x8xbf16>, vector<2x8x32xbf16>, vector<2x8x32xf32> -> vector<2x8x32xf32>
    "tpu.trace_stop"() : () -> ()
    %68 = vector.extract_strided_slice %4 {offsets = [0, 0, 96], sizes = [2, 8, 32], strides = [1, 1, 1]} : vector<2x8x384xf32> to vector<2x8x32xf32>
    %69 = arith.truncf %68 : vector<2x8x32xf32> to vector<2x8x32xbf16>
    %70 = vector.extract_strided_slice %4 {offsets = [0, 0, 224], sizes = [2, 8, 32], strides = [1, 1, 1]} : vector<2x8x384xf32> to vector<2x8x32xf32>
    %71 = arith.truncf %70 : vector<2x8x32xf32> to vector<2x8x32xbf16>
    %72 = vector.extract_strided_slice %4 {offsets = [0, 0, 352], sizes = [2, 8, 32], strides = [1, 1, 1]} : vector<2x8x384xf32> to vector<2x8x32xf32>
    %73 = arith.truncf %72 : vector<2x8x32xf32> to vector<2x8x32xbf16>
    "tpu.trace_start"() <{level = 10 : i32, message = "btk,bsk->bts"}> : () -> ()
    %cst_22 = arith.constant dense<0.000000e+00> : vector<2x8x8xf32>
    %74 = tpu.matmul %69, %71, %cst_22 {dimension_numbers = #tpu.dot_dimension_numbers<[2], [2], [1], [1], [0, 0, 0, 1, 1, 1], [0], [0]>} : vector<2x8x32xbf16>, vector<2x8x32xbf16>, vector<2x8x8xf32> -> vector<2x8x8xf32>
    "tpu.trace_stop"() : () -> ()
    %cst_23 = arith.constant dense<0xFF800000> : vector<2x8xf32>
    %75 = vector.multi_reduction <maximumf>, %74, %cst_23 [2] : vector<2x8x8xf32> to vector<2x8xf32>
    %76 = vector.shape_cast %75 : vector<2x8xf32> to vector<2x8x1xf32>
    %77 = vector.broadcast %76 : vector<2x8x1xf32> to vector<2x8x8xf32>
    %78 = arith.subf %74, %77 : vector<2x8x8xf32>
    %79 = math.exp %78 : vector<2x8x8xf32>
    %cst_24 = arith.constant dense<0.000000e+00> : vector<2x8xf32>
    %80 = vector.multi_reduction <add>, %79, %cst_24 [2] : vector<2x8x8xf32> to vector<2x8xf32>
    %81 = vector.shape_cast %80 : vector<2x8xf32> to vector<2x8x1xf32>
    %82 = tpu.reciprocal %81 {approx = true} : vector<2x8x1xf32> -> vector<2x8x1xf32>
    %83 = vector.broadcast %82 : vector<2x8x1xf32> to vector<2x8x8xf32>
    %84 = arith.mulf %79, %83 : vector<2x8x8xf32>
    %85 = arith.truncf %84 : vector<2x8x8xf32> to vector<2x8x8xbf16>
    "tpu.trace_start"() <{level = 10 : i32, message = "bts,bsk->btk"}> : () -> ()
    %cst_25 = arith.constant dense<0.000000e+00> : vector<2x8x32xf32>
    %86 = tpu.matmul %85, %73, %cst_25 {dimension_numbers = #tpu.dot_dimension_numbers<[2], [1], [1], [2], [0, 0, 0, 1, 1, 2], [0], [0]>} : vector<2x8x8xbf16>, vector<2x8x32xbf16>, vector<2x8x32xf32> -> vector<2x8x32xf32>
    "tpu.trace_stop"() : () -> ()
    %87 = tpu.concatenate %29, %48, %67, %86 in 2 : vector<2x8x32xf32>, vector<2x8x32xf32>, vector<2x8x32xf32>, vector<2x8x32xf32> -> vector<2x8x128xf32>
    %88 = vector.shape_cast %87 : vector<2x8x128xf32> to vector<16x128xf32>
    %89 = arith.truncf %88 : vector<16x128xf32> to vector<16x128xbf16>
    %c0_26 = arith.constant 0 : index
    %c0_27 = arith.constant 0 : index
    %90 = vector.load %arg3[%c0_26, %c0_27] : memref<128x32xbf16, #tpu.memory_space<vmem>>, vector<128x32xbf16>
    %cst_28 = arith.constant dense<0.000000e+00> : vector<16x32xf32>
    %91 = tpu.matmul %89, %90, %cst_28 {dimension_numbers = #tpu.dot_dimension_numbers<[1], [0], [0], [1], [0, 0, 1, 1], [], []>} : vector<16x128xbf16>, vector<128x32xbf16>, vector<16x32xf32> -> vector<16x32xf32>
    %92 = vector.broadcast %5 : vector<1x32xf32> to vector<16x32xf32>
    %93 = arith.addf %91, %92 : vector<16x32xf32>
    %94 = arith.addf %93, %1 : vector<16x32xf32>
    %cst_29 = arith.constant dense<0.000000e+00> : vector<16xf32>
    %95 = vector.multi_reduction <add>, %94, %cst_29 [1] : vector<16x32xf32> to vector<16xf32>
    %96 = vector.shape_cast %95 : vector<16xf32> to vector<16x1xf32>
    %cst_30 = arith.constant 3.200000e+01 : f32
    %97 = vector.broadcast %cst_30 : f32 to vector<16x1xf32>
    %98 = arith.divf %96, %97 : vector<16x1xf32>
    %99 = vector.broadcast %98 : vector<16x1xf32> to vector<16x32xf32>
    %100 = arith.subf %94, %99 : vector<16x32xf32>
    %101 = arith.mulf %100, %100 : vector<16x32xf32>
    %cst_31 = arith.constant dense<0.000000e+00> : vector<16xf32>
    %102 = vector.multi_reduction <add>, %101, %cst_31 [1] : vector<16x32xf32> to vector<16xf32>
    %103 = vector.shape_cast %102 : vector<16xf32> to vector<16x1xf32>
    %cst_32 = arith.constant 3.200000e+01 : f32
    %104 = vector.broadcast %cst_32 : f32 to vector<16x1xf32>
    %105 = arith.divf %103, %104 : vector<16x1xf32>
    %106 = vector.broadcast %98 : vector<16x1xf32> to vector<16x32xf32>
    %107 = arith.subf %94, %106 : vector<16x32xf32>
    %cst_33 = arith.constant 9.99999974E-6 : f32
    %108 = vector.broadcast %cst_33 : f32 to vector<16x1xf32>
    %109 = arith.addf %105, %108 : vector<16x1xf32>
    %110 = math.rsqrt %109 : vector<16x1xf32>
    %111 = vector.broadcast %110 : vector<16x1xf32> to vector<16x32xf32>
    %112 = arith.mulf %107, %111 : vector<16x32xf32>
    %113 = vector.broadcast %6 : vector<1x32xf32> to vector<16x32xf32>
    %114 = arith.mulf %112, %113 : vector<16x32xf32>
    %115 = vector.broadcast %7 : vector<1x32xf32> to vector<16x32xf32>
    %116 = arith.addf %114, %115 : vector<16x32xf32>
    %117 = arith.truncf %116 : vector<16x32xf32> to vector<16x32xbf16>
    %c0_34 = arith.constant 0 : index
    %c0_35 = arith.constant 0 : index
    %118 = vector.load %arg4[%c0_34, %c0_35] : memref<32x128xbf16, #tpu.memory_space<vmem>>, vector<32x128xbf16>
    %cst_36 = arith.constant dense<0.000000e+00> : vector<16x128xf32>
    %119 = tpu.matmul %117, %118, %cst_36 {dimension_numbers = #tpu.dot_dimension_numbers<[1], [0], [0], [1], [0, 0, 1, 1], [], []>} : vector<16x32xbf16>, vector<32x128xbf16>, vector<16x128xf32> -> vector<16x128xf32>
    %c0_37 = arith.constant 0 : index
    %c0_38 = arith.constant 0 : index
    %120 = vector.load %arg7[%c0_37, %c0_38] : memref<1x128xf32, #tpu.memory_space<vmem>>, vector<1x128xf32>
    %121 = vector.broadcast %120 : vector<1x128xf32> to vector<16x128xf32>
    %122 = arith.addf %119, %121 : vector<16x128xf32>
    %cst_39 = arith.constant 0.000000e+00 : f32
    %123 = vector.broadcast %cst_39 : f32 to vector<16x128xf32>
    %124 = arith.maximumf %122, %123 : vector<16x128xf32>
    %125 = arith.truncf %124 : vector<16x128xf32> to vector<16x128xbf16>
    %c0_40 = arith.constant 0 : index
    %c0_41 = arith.constant 0 : index
    %126 = vector.load %arg5[%c0_40, %c0_41] : memref<128x32xbf16, #tpu.memory_space<vmem>>, vector<128x32xbf16>
    %cst_42 = arith.constant dense<0.000000e+00> : vector<16x32xf32>
    %127 = tpu.matmul %125, %126, %cst_42 {dimension_numbers = #tpu.dot_dimension_numbers<[1], [0], [0], [1], [0, 0, 1, 1], [], []>} : vector<16x128xbf16>, vector<128x32xbf16>, vector<16x32xf32> -> vector<16x32xf32>
    %128 = vector.broadcast %8 : vector<1x32xf32> to vector<16x32xf32>
    %129 = arith.addf %127, %128 : vector<16x32xf32>
    %130 = arith.addf %129, %116 : vector<16x32xf32>
    %cst_43 = arith.constant dense<0.000000e+00> : vector<16xf32>
    %131 = vector.multi_reduction <add>, %130, %cst_43 [1] : vector<16x32xf32> to vector<16xf32>
    %132 = vector.shape_cast %131 : vector<16xf32> to vector<16x1xf32>
    %cst_44 = arith.constant 3.200000e+01 : f32
    %133 = vector.broadcast %cst_44 : f32 to vector<16x1xf32>
    %134 = arith.divf %132, %133 : vector<16x1xf32>
    %135 = vector.broadcast %134 : vector<16x1xf32> to vector<16x32xf32>
    %136 = arith.subf %130, %135 : vector<16x32xf32>
    %137 = arith.mulf %136, %136 : vector<16x32xf32>
    %cst_45 = arith.constant dense<0.000000e+00> : vector<16xf32>
    %138 = vector.multi_reduction <add>, %137, %cst_45 [1] : vector<16x32xf32> to vector<16xf32>
    %139 = vector.shape_cast %138 : vector<16xf32> to vector<16x1xf32>
    %cst_46 = arith.constant 3.200000e+01 : f32
    %140 = vector.broadcast %cst_46 : f32 to vector<16x1xf32>
    %141 = arith.divf %139, %140 : vector<16x1xf32>
    %142 = vector.broadcast %134 : vector<16x1xf32> to vector<16x32xf32>
    %143 = arith.subf %130, %142 : vector<16x32xf32>
    %cst_47 = arith.constant 9.99999974E-6 : f32
    %144 = vector.broadcast %cst_47 : f32 to vector<16x1xf32>
    %145 = arith.addf %141, %144 : vector<16x1xf32>
    %146 = math.rsqrt %145 : vector<16x1xf32>
    %147 = vector.broadcast %146 : vector<16x1xf32> to vector<16x32xf32>
    %148 = arith.mulf %143, %147 : vector<16x32xf32>
    %149 = vector.broadcast %9 : vector<1x32xf32> to vector<16x32xf32>
    %150 = arith.mulf %148, %149 : vector<16x32xf32>
    %151 = vector.broadcast %10 : vector<1x32xf32> to vector<16x32xf32>
    %152 = arith.addf %150, %151 : vector<16x32xf32>
    %153 = arith.truncf %152 : vector<16x32xf32> to vector<16x32xbf16>
    %c0_48 = arith.constant 0 : index
    %c0_49 = arith.constant 0 : index
    %154 = vector.load %arg8[%c0_48, %c0_49] : memref<16x32xbf16, #tpu.memory_space<vmem>>, vector<16x32xbf16>
    tpu.vector_store %arg8[%c0_48, %c0_49], %153 {strides = array<i32>} : memref<16x32xbf16, #tpu.memory_space<vmem>>, vector<16x32xbf16>,
    return
  }
  func.func @transform_0(%arg0: i32) -> (i32, i32) {
    %c0_i32 = arith.constant 0 : i32
    %c0_i32_0 = arith.constant 0 : i32
    return %arg0, %c0_i32 : i32, i32
  }
  func.func @transform_1(%arg0: i32) -> (i32, i32) {
    %c0_i32 = arith.constant 0 : i32
    %c0_i32_0 = arith.constant 0 : i32
    %c0_i32_1 = arith.constant 0 : i32
    return %c0_i32, %c0_i32_0 : i32, i32
  }
  func.func @transform_2(%arg0: i32) -> (i32, i32) {
    %c0_i32 = arith.constant 0 : i32
    %c0_i32_0 = arith.constant 0 : i32
    %c0_i32_1 = arith.constant 0 : i32
    return %c0_i32, %c0_i32_0 : i32, i32
  }
  func.func @transform_3(%arg0: i32) -> (i32, i32) {
    %c0_i32 = arith.constant 0 : i32
    %c0_i32_0 = arith.constant 0 : i32
    %c0_i32_1 = arith.constant 0 : i32
    return %c0_i32, %c0_i32_0 : i32, i32
  }
  func.func @transform_4(%arg0: i32) -> (i32, i32) {
    %c0_i32 = arith.constant 0 : i32
    %c0_i32_0 = arith.constant 0 : i32
    %c0_i32_1 = arith.constant 0 : i32
    return %c0_i32, %c0_i32_0 : i32, i32
  }
  func.func @transform_5(%arg0: i32) -> (i32, i32) {
    %c0_i32 = arith.constant 0 : i32
    %c0_i32_0 = arith.constant 0 : i32
    %c0_i32_1 = arith.constant 0 : i32
    return %c0_i32, %c0_i32_0 : i32, i32
  }
  func.func @transform_6(%arg0: i32) -> (i32, i32) {
    %c0_i32 = arith.constant 0 : i32
    %c0_i32_0 = arith.constant 0 : i32
    %c0_i32_1 = arith.constant 0 : i32
    return %c0_i32, %c0_i32_0 : i32, i32
  }
  func.func @transform_7(%arg0: i32) -> (i32, i32) {
    %c0_i32 = arith.constant 0 : i32
    %c0_i32_0 = arith.constant 0 : i32
    return %arg0, %c0_i32 : i32, i32
  }
}

</mosaic_0001>

<llo_original>
// kernel: tpu_custom_call.1
$region0: #{tpu_custom_call.1}
  #allocation0 [shape = 'u32[]', space=smem, size = 0x4, offset = 0x4, fixed_abs, tag = 'smem constant byte address 0x4 - core index']
  #allocation1 [shape = 'u32[144,128]{1,0:T(1,128)}', space=vmem, size = 0x12000, scoped, tag = 'internal scratch']
  %s0 = inlined_call_operand.hbm [shape: bf16[16,32], index: 0, kind: input, shape index: {}]
  %s1 = inlined_call_operand.hbm [shape: bf16[32,384], index: 1, kind: input, shape index: {}]
  %s2 = inlined_call_operand.hbm [shape: bf16[128,32], index: 2, kind: input, shape index: {}]
  %s3 = inlined_call_operand.hbm [shape: bf16[32,128], index: 3, kind: input, shape index: {}]
  %s4 = inlined_call_operand.hbm [shape: bf16[128,32], index: 4, kind: input, shape index: {}]
  %s5 = inlined_call_operand.hbm [shape: f32[6,32], index: 5, kind: input, shape index: {}]
  %s6 = inlined_call_operand.hbm [shape: f32[1,128], index: 6, kind: input, shape index: {}]
  %s7 = inlined_call_operand.hbm [shape: bf16[16,32], index: 7, kind: output, shape index: {}]
  %s8 = sld [smem:[#allocation0]]
  $region66: #{tpu_custom_call.1} parent=0
    _
  %s10 = ssub.s32 1, %s8
  %s11 = scalar_select 0, %s10, %s8
  $region1: #{tpu_custom_call.1} parent=0
    #allocation2 [shape = 'u8[4096]{0}', space=vmem, size = 0x1000, scoped, tag = 'input window, operand 0, single buffered']
    #allocation3 [shape = 's32[1]{0}', space=sflag, size = 0x4, scoped, tag = 'scoped memory for tpu_custom_call.1']
    #allocation4 [shape = 's32[1]{0}', space=sflag, size = 0x4, scoped, tag = 'scoped memory for tpu_custom_call.1']
    #allocation5 [shape = 'u8[24576]{0}', space=vmem, size = 0x6000, scoped, tag = 'input window, operand 1, single buffered']
    #allocation6 [shape = 's32[1]{0}', space=sflag, size = 0x4, scoped, tag = 'scoped memory for tpu_custom_call.1']
    #allocation7 [shape = 'u8[32768]{0}', space=vmem, size = 0x8000, scoped, tag = 'input window, operand 2, single buffered']
    #allocation8 [shape = 'u8[8192]{0}', space=vmem, size = 0x2000, scoped, tag = 'input window, operand 3, single buffered']
    #allocation9 [shape = 's32[1]{0}', space=sflag, size = 0x4, scoped, tag = 'scoped memory for tpu_custom_call.1']
    #allocation10 [shape = 'u8[32768]{0}', space=vmem, size = 0x8000, scoped, tag = 'input window, operand 4, single buffered']
    #allocation11 [shape = 'u8[4096]{0}', space=vmem, size = 0x1000, scoped, tag = 'input window, operand 5, single buffered']
    #allocation12 [shape = 's32[1]{0}', space=sflag, size = 0x4, scoped, tag = 'scoped memory for tpu_custom_call.1']
    #allocation13 [shape = 'u8[512]{0}', space=vmem, size = 0x400, scoped, tag = 'input window, operand 6, single buffered']
    #allocation14 [shape = 'u8[4096]{0}', space=vmem, size = 0x1000, scoped, tag = 'output window, operand 0, single buffered']
    %12 = vsyncpa [#allocation3], 0
    %13 = vsyncpa [#allocation6], 0
    %14 = vsyncpa [#allocation9], 0
    %15 = vsyncpa [#allocation12], 0
    %16 = vsyncpa [#allocation4], 0
    // Predicated region
    $region2: #{tpu_custom_call.1} parent=1 // pred_check
      _
    $region3: #{tpu_custom_call.1} parent=1 // pred_check_branch
      %18 = sbr.rel (0) target = $region5
    $region4: #{tpu_custom_call.1} parent=1 // pred_region
      %s20 = ssub.s32 128, 128
      %21 = vsyncadd [#allocation3], %s20
      %s22 = sshll.u32 [#allocation2], 4
      %s23 = int_to_ptr.vmem [resolvable:$true] %s22
      %28 = dma.hbm_to_vmem [thread:$0]  %s0, 128, %s23, [#allocation3], 64, 64, 4
    $region5: #{tpu_custom_call.1} parent=1 // pred_fallthru
      _
    // Predicated region
    $region6: #{tpu_custom_call.1} parent=1 // pred_check
      _
    $region7: #{tpu_custom_call.1} parent=1 // pred_check_branch
      %30 = sbr.rel (0) target = $region9
    $region8: #{tpu_custom_call.1} parent=1 // pred_region
      %s32 = ssub.s32 768, 768
      %33 = vsyncadd [#allocation6], %s32
      %s34 = sshll.u32 [#allocation5], 4
      %s35 = int_to_ptr.vmem [resolvable:$true] %s34
      %40 = dma.hbm_to_vmem [thread:$0]  %s1, 768, %s35, [#allocation6], 192, 192, 12
    $region9: #{tpu_custom_call.1} parent=1 // pred_fallthru
      _
    // Predicated region
    $region10: #{tpu_custom_call.1} parent=1 // pred_check
      _
    $region11: #{tpu_custom_call.1} parent=1 // pred_check_branch
      %42 = sbr.rel (0) target = $region13
    $region12: #{tpu_custom_call.1} parent=1 // pred_region
      %s44 = ssub.s32 1024, 1024
      %45 = vsyncadd [#allocation6], %s44
      %s46 = sshll.u32 [#allocation7], 4
      %s47 = int_to_ptr.vmem [resolvable:$true] %s46
      %52 = dma.hbm_to_vmem [thread:$0]  %s2, 1024, %s47, [#allocation6], 64, 64, 4
    $region13: #{tpu_custom_call.1} parent=1 // pred_fallthru
      _
    // Predicated region
    $region14: #{tpu_custom_call.1} parent=1 // pred_check
      _
    $region15: #{tpu_custom_call.1} parent=1 // pred_check_branch
      %54 = sbr.rel (0) target = $region17
    $region16: #{tpu_custom_call.1} parent=1 // pred_region
      %s56 = ssub.s32 256, 256
      %57 = vsyncadd [#allocation9], %s56
      %s58 = sshll.u32 [#allocation8], 4
      %s59 = int_to_ptr.vmem [resolvable:$true] %s58
      %64 = dma.hbm_to_vmem [thread:$0]  %s3, 256, %s59, [#allocation9], 64, 64, 4
    $region17: #{tpu_custom_call.1} parent=1 // pred_fallthru
      _
    // Predicated region
    $region18: #{tpu_custom_call.1} parent=1 // pred_check
      _
    $region19: #{tpu_custom_call.1} parent=1 // pred_check_branch
      %66 = sbr.rel (0) target = $region21
    $region20: #{tpu_custom_call.1} parent=1 // pred_region
      %s68 = ssub.s32 1024, 1024
      %69 = vsyncadd [#allocation9], %s68
      %s70 = sshll.u32 [#allocation10], 4
      %s71 = int_to_ptr.vmem [resolvable:$true] %s70
      %76 = dma.hbm_to_vmem [thread:$0]  %s4, 1024, %s71, [#allocation9], 64, 64, 4
    $region21: #{tpu_custom_call.1} parent=1 // pred_fallthru
      _
    // Predicated region
    $region22: #{tpu_custom_call.1} parent=1 // pred_check
      _
    $region23: #{tpu_custom_call.1} parent=1 // pred_check_branch
      %78 = sbr.rel (0) target = $region25
    $region24: #{tpu_custom_call.1} parent=1 // pred_region
      %s80 = ssub.s32 128, 128
      %81 = vsyncadd [#allocation12], %s80
      %s83 = sshll.u32 [#allocation11], 4
      %s84 = int_to_ptr.vmem [resolvable:$true] %s83
      %86 = dma.hbm_to_vmem [thread:$0]  %s5, 128, %s84, [#allocation12]
    $region25: #{tpu_custom_call.1} parent=1 // pred_fallthru
      _
    // Predicated region
    $region26: #{tpu_custom_call.1} parent=1 // pred_check
      _
    $region27: #{tpu_custom_call.1} parent=1 // pred_check_branch
      %88 = sbr.rel (0) target = $region29
    $region28: #{tpu_custom_call.1} parent=1 // pred_region
      %s90 = ssub.s32 16, 16
      %91 = vsyncadd [#allocation12], %s90
      %s93 = sshll.u32 [#allocation13], 4
      %s94 = int_to_ptr.vmem [resolvable:$true] %s93
      %96 = dma.hbm_to_vmem [thread:$0]  %s6, 16, %s94, [#allocation12]
    $region29: #{tpu_custom_call.1} parent=1 // pred_fallthru
      _
    // Predicated region
    $region30: #{tpu_custom_call.1} parent=1 // pred_check
      _
    $region31: #{tpu_custom_call.1} parent=1 // pred_check_branch
      %98 = sbr.rel (0) target = $region33
    $region32: #{tpu_custom_call.1} parent=1 // pred_region
      %99 = dma.done [#allocation3], 128
    $region33: #{tpu_custom_call.1} parent=1 // pred_fallthru
      _
    // Predicated region
    $region34: #{tpu_custom_call.1} parent=1 // pred_check
      _
    $region35: #{tpu_custom_call.1} parent=1 // pred_check_branch
      %101 = sbr.rel (0) target = $region37
    $region36: #{tpu_custom_call.1} parent=1 // pred_region
      %102 = dma.done [#allocation6], 768
    $region37: #{tpu_custom_call.1} parent=1 // pred_fallthru
      _
    // Predicated region
    $region38: #{tpu_custom_call.1} parent=1 // pred_check
      _
    $region39: #{tpu_custom_call.1} parent=1 // pred_check_branch
      %104 = sbr.rel (0) target = $region41
    $region40: #{tpu_custom_call.1} parent=1 // pred_region
      %105 = dma.done [#allocation6], 1024
    $region41: #{tpu_custom_call.1} parent=1 // pred_fallthru
      _
    // Predicated region
    $region42: #{tpu_custom_call.1} parent=1 // pred_check
      _
    $region43: #{tpu_custom_call.1} parent=1 // pred_check_branch
      %107 = sbr.rel (0) target = $region45
    $region44: #{tpu_custom_call.1} parent=1 // pred_region
      %108 = dma.done [#allocation9], 256
    $region45: #{tpu_custom_call.1} parent=1 // pred_fallthru
      _
    // Predicated region
    $region46: #{tpu_custom_call.1} parent=1 // pred_check
      _
    $region47: #{tpu_custom_call.1} parent=1 // pred_check_branch
      %110 = sbr.rel (0) target = $region49
    $region48: #{tpu_custom_call.1} parent=1 // pred_region
      %111 = dma.done [#allocation9], 1024
    $region49: #{tpu_custom_call.1} parent=1 // pred_fallthru
      _
    // Predicated region
    $region50: #{tpu_custom_call.1} parent=1 // pred_check
      _
    $region51: #{tpu_custom_call.1} parent=1 // pred_check_branch
      %113 = sbr.rel (0) target = $region53
    $region52: #{tpu_custom_call.1} parent=1 // pred_region
      %114 = dma.done [#allocation12], 128
    $region53: #{tpu_custom_call.1} parent=1 // pred_fallthru
      _
    // Predicated region
    $region54: #{tpu_custom_call.1} parent=1 // pred_check
      _
    $region55: #{tpu_custom_call.1} parent=1 // pred_check_branch
      %116 = sbr.rel (0) target = $region57
    $region56: #{tpu_custom_call.1} parent=1 // pred_region
      %117 = dma.done [#allocation12], 16
    $region57: #{tpu_custom_call.1} parent=1 // pred_fallthru
      _
    %v119 = vld [vmem:[#allocation2] sm:$0xf]
    %v120 = vld [vmem:[#allocation2 + $0x4] sm:$0xf]
    %v121 = vunpack.c.l.bf16 %v119
    %v122 = vunpack.c.l.bf16 %v120
    %v123 = vld [vmem:[#allocation5] sm:$0xff]
    %v124 = vld [vmem:[#allocation5 + $0x8] sm:$0xf]
    %v125 = vld [vmem:[#allocation5 + $0xc] sm:$0xff]
    %v126 = vld [vmem:[#allocation5 + $0x14] sm:$0xf]
    %v127 = vld [vmem:[#allocation5 + $0x18] sm:$0xff]
    %v128 = vld [vmem:[#allocation5 + $0x20] sm:$0xf]
    %v129 = vld [vmem:[#allocation5 + $0x24] sm:$0xff]
    %v130 = vld [vmem:[#allocation5 + $0x2c] sm:$0xf]
    %v133 = vunpack.c.l.b16 %v119
    %v134 = vunpack.c.l.b16 %v120
    %v135 = vpack.c.b16 %v134, %v133
    %v144 = vunpack.c.l.b16 %v123
    %v145 = vunpack.c.h.b16 %v123
    %v146 = vunpack.c.l.b16 %v124
    %v147 = vunpack.c.l.b16 %v125
    %v148 = vunpack.c.h.b16 %v125
    %v149 = vunpack.c.l.b16 %v126
    %v150 = vunpack.c.l.b16 %v127
    %v151 = vunpack.c.h.b16 %v127
    %v152 = vunpack.c.l.b16 %v128
    %v153 = vunpack.c.l.b16 %v129
    %v154 = vunpack.c.h.b16 %v129
    %v155 = vunpack.c.l.b16 %v130
    %v156 = vpack.c.b16 %v147, %v144
    %v157 = vpack.c.b16 %v148, %v145
    %v158 = vpack.c.b16 %v149, %v146
    %v159 = vpack.c.b16 %v153, %v150
    %v160 = vpack.c.b16 %v154, %v151
    %v161 = vpack.c.b16 %v155, %v152
    %vm168 = vcmask 261120
    %v170 = vsel %vm168, %v135, 0
    %172 = vmatprep.subr.bf16.mxu0 %v157
    %173 = vmatpush1.bf16.msra.mxu0 %v156
    %174 = vmatprep.subr.bf16.mxu0 %v160
    %175 = vmatpush1.bf16.msra.mxu0 %v159
    %176 = vmatprep.subr.bf16.mxu0 0
    %177 = vmatpush1.bf16.msra.mxu0 0
    %178 = vmatprep.subr.bf16.mxu0 0
    %179 = vmatpush1.bf16.msra.mxu0 0
    %180 = vmatprep.subr.bf16.mxu0 0
    %181 = vmatpush1.bf16.msra.mxu0 0
    %182 = vmatprep.subr.bf16.mxu0 0
    %183 = vmatpush1.bf16.msra.mxu0 0
    %184 = vmatprep.subr.bf16.mxu0 0
    %185 = vmatpush1.bf16.msra.mxu0 0
    %186 = vmatprep.subr.bf16.mxu0 0
    %187 = vmatpush1.bf16.msra.mxu0 0
    %188 = vmatprep.subr.bf16.mxu0 0
    %189 = vmatpush1.bf16.msra.mxu0 0
    %190 = vmatprep.subr.bf16.mxu0 0
    %191 = vmatpush1.bf16.msra.mxu0 0
    %192 = vmatprep.subr.bf16.mxu0 0
    %193 = vmatpush1.bf16.msra.mxu0 0
    %194 = vmatprep.subr.bf16.mxu0 0
    %195 = vmatpush1.bf16.msra.mxu0 0
    %196 = vmatprep.subr.bf16.mxu0 0
    %197 = vmatpush1.bf16.msra.mxu0 0
    %198 = vmatprep.subr.bf16.mxu0 0
    %199 = vmatpush1.bf16.msra.mxu0 0
    %200 = vmatprep.subr.bf16.mxu0 0
    %201 = vmatpush1.bf16.msra.mxu0 0
    %202 = vmatprep.subr.bf16.mxu0 0
    %203 = vmatpush1.bf16.msra.mxu0 0
    %204 = vmatprep.mubr.bf16.mxu0 0
    %205 = vmatmul.mubr.bf16.gmra.mrb[0].mxu0 %v170
    %v206 = vpop.f32.mrb[0].mxu0
    %v207 = vadd.f32 0.0, %v206
    %v208 = vpop.f32.mrb[0].mxu0
    %v209 = vadd.f32 0.0, %v208
    %v210 = vpop.f32.mrb[0].mxu0
    %v211 = vadd.f32 0.0, %v210
    %v212 = vpop.f32.mrb[0].mxu0
    %v213 = vadd.f32 0.0, %v212
    %214 = vdwg.mxu0
    %215 = vmatprep.subr.bf16.mxu0 0
    %216 = vmatpush1.bf16.msra.mxu0 %v158
    %217 = vmatprep.subr.bf16.mxu0 0
    %218 = vmatpush1.bf16.msra.mxu0 %v161
    %219 = vmatprep.subr.bf16.mxu0 0
    %220 = vmatpush1.bf16.msra.mxu0 0
    %221 = vmatprep.subr.bf16.mxu0 0
    %222 = vmatpush1.bf16.msra.mxu0 0
    %223 = vmatprep.subr.bf16.mxu0 0
    %224 = vmatpush1.bf16.msra.mxu0 0
    %225 = vmatprep.subr.bf16.mxu0 0
    %226 = vmatpush1.bf16.msra.mxu0 0
    %227 = vmatprep.subr.bf16.mxu0 0
    %228 = vmatpush1.bf16.msra.mxu0 0
    %229 = vmatprep.subr.bf16.mxu0 0
    %230 = vmatpush1.bf16.msra.mxu0 0
    %231 = vmatprep.subr.bf16.mxu0 0
    %232 = vmatpush1.bf16.msra.mxu0 0
    %233 = vmatprep.subr.bf16.mxu0 0
    %234 = vmatpush1.bf16.msra.mxu0 0
    %235 = vmatprep.subr.bf16.mxu0 0
    %236 = vmatpush1.bf16.msra.mxu0 0
    %237 = vmatprep.subr.bf16.mxu0 0
    %238 = vmatpush1.bf16.msra.mxu0 0
    %239 = vmatprep.subr.bf16.mxu0 0
    %240 = vmatpush1.bf16.msra.mxu0 0
    %241 = vmatprep.subr.bf16.mxu0 0
    %242 = vmatpush1.bf16.msra.mxu0 0
    %243 = vmatprep.subr.bf16.mxu0 0
    %244 = vmatpush1.bf16.msra.mxu0 0
    %245 = vmatprep.subr.bf16.mxu0 0
    %246 = vmatpush1.bf16.msra.mxu0 0
    %247 = vmatprep.mubr.bf16.mxu0 0
    %248 = vmatmul.mubr.bf16.gmra.mrb[0].mxu0 %v170
    %v249 = vpop.f32.mrb[0].mxu0
    %v250 = vadd.f32 0.0, %v249
    %v251 = vpop.f32.mrb[0].mxu0
    %v252 = vpop.f32.mrb[0].mxu0
    %v253 = vadd.f32 0.0, %v252
    %v254 = vpop.f32.mrb[0].mxu0
    %255 = vdwg.mxu0
    %v256 = vld [vmem:[#allocation11] sm:$0x1]
    %v257 = vld [vmem:[#allocation11 + $0x1] sm:$0x1]
    %v258 = vld [vmem:[#allocation11 + $0x2] sm:$0x1]
    %v259 = vld [vmem:[#allocation11 + $0x3] sm:$0x1]
    %v260 = vld [vmem:[#allocation11 + $0x4] sm:$0x1]
    %v261 = vld [vmem:[#allocation11 + $0x5] sm:$0x1]
    %v262 = vpack.c.bf16 %v207, %v207
    %v263 = vpack.c.bf16 %v211, %v211
    %v264 = vpack.c.bf16 %v209, %v209
    %v265 = vpack.c.bf16 %v213, %v213
    %v266 = vpack.c.bf16 %v250, %v250
    %v267 = vpack.c.bf16 %v253, %v253
    %v269 = vsel %vm168, %v262, 0
    %v272 = vsel %vm168, %v264, 0
    %274 = vmatprep.subr.bf16.mxu0 0
    %275 = vmatpush1.bf16.xpose.msra.mxu0 %v272
    %276 = vmatprep.subr.bf16.mxu0 0
    %277 = vmatpush1.bf16.xpose.msra.mxu0 0
    %278 = vmatprep.subr.bf16.mxu0 0
    %279 = vmatpush1.bf16.xpose.msra.mxu0 0
    %280 = vmatprep.subr.bf16.mxu0 0
    %281 = vmatpush1.bf16.xpose.msra.mxu0 0
    %282 = vmatprep.subr.bf16.mxu0 0
    %283 = vmatpush1.bf16.xpose.msra.mxu0 0
    %284 = vmatprep.subr.bf16.mxu0 0
    %285 = vmatpush1.bf16.xpose.msra.mxu0 0
    %286 = vmatprep.subr.bf16.mxu0 0
    %287 = vmatpush1.bf16.xpose.msra.mxu0 0
    %288 = vmatprep.subr.bf16.mxu0 0
    %289 = vmatpush1.bf16.xpose.msra.mxu0 0
    %290 = vmatprep.subr.bf16.mxu0 0
    %291 = vmatpush1.bf16.xpose.msra.mxu0 0
    %292 = vmatprep.subr.bf16.mxu0 0
    %293 = vmatpush1.bf16.xpose.msra.mxu0 0
    %294 = vmatprep.subr.bf16.mxu0 0
    %295 = vmatpush1.bf16.xpose.msra.mxu0 0
    %296 = vmatprep.subr.bf16.mxu0 0
    %297 = vmatpush1.bf16.xpose.msra.mxu0 0
    %298 = vmatprep.subr.bf16.mxu0 0
    %299 = vmatpush1.bf16.xpose.msra.mxu0 0
    %300 = vmatprep.subr.bf16.mxu0 0
    %301 = vmatpush1.bf16.xpose.msra.mxu0 0
    %302 = vmatprep.subr.bf16.mxu0 0
    %303 = vmatpush1.bf16.xpose.msra.mxu0 0
    %304 = vmatprep.subr.bf16.mxu0 0
    %305 = vmatpush1.bf16.xpose.msra.mxu0 0
    %306 = vmatprep.mubr.bf16.mxu0 0
    %307 = vmatmul.mubr.bf16.gmra.mrb[0].mxu0 %v269
    %v308 = vpop.f32.mrb[0].mxu0
    %v309 = vadd.f32 0.0, %v308
    %v310 = vpop.f32.mrb[0].mxu0
    %v311 = vpop.f32.mrb[0].mxu0
    %v312 = vpop.f32.mrb[0].mxu0
    %313 = vdwg.mxu0
    %v315 = vsel %vm168, %v263, 0
    %v318 = vsel %vm168, %v265, 0
    %320 = vmatprep.subr.bf16.mxu0 0
    %321 = vmatpush1.bf16.xpose.msra.mxu0 %v318
    %322 = vmatprep.subr.bf16.mxu0 0
    %323 = vmatpush1.bf16.xpose.msra.mxu0 0
    %324 = vmatprep.subr.bf16.mxu0 0
    %325 = vmatpush1.bf16.xpose.msra.mxu0 0
    %326 = vmatprep.subr.bf16.mxu0 0
    %327 = vmatpush1.bf16.xpose.msra.mxu0 0
    %328 = vmatprep.subr.bf16.mxu0 0
    %329 = vmatpush1.bf16.xpose.msra.mxu0 0
    %330 = vmatprep.subr.bf16.mxu0 0
    %331 = vmatpush1.bf16.xpose.msra.mxu0 0
    %332 = vmatprep.subr.bf16.mxu0 0
    %333 = vmatpush1.bf16.xpose.msra.mxu0 0
    %334 = vmatprep.subr.bf16.mxu0 0
    %335 = vmatpush1.bf16.xpose.msra.mxu0 0
    %336 = vmatprep.subr.bf16.mxu0 0
    %337 = vmatpush1.bf16.xpose.msra.mxu0 0
    %338 = vmatprep.subr.bf16.mxu0 0
    %339 = vmatpush1.bf16.xpose.msra.mxu0 0
    %340 = vmatprep.subr.bf16.mxu0 0
    %341 = vmatpush1.bf16.xpose.msra.mxu0 0
    %342 = vmatprep.subr.bf16.mxu0 0
    %343 = vmatpush1.bf16.xpose.msra.mxu0 0
    %344 = vmatprep.subr.bf16.mxu0 0
    %345 = vmatpush1.bf16.xpose.msra.mxu0 0
    %346 = vmatprep.subr.bf16.mxu0 0
    %347 = vmatpush1.bf16.xpose.msra.mxu0 0
    %348 = vmatprep.subr.bf16.mxu0 0
    %349 = vmatpush1.bf16.xpose.msra.mxu0 0
    %350 = vmatprep.subr.bf16.mxu0 0
    %351 = vmatpush1.bf16.xpose.msra.mxu0 0
    %352 = vmatprep.mubr.bf16.mxu0 0
    %353 = vmatmul.mubr.bf16.gmra.mrb[0].mxu0 %v315
    %v354 = vpop.f32.mrb[0].mxu0
    %v355 = vadd.f32 0.0, %v354
    %v356 = vpop.f32.mrb[0].mxu0
    %v357 = vpop.f32.mrb[0].mxu0
    %v358 = vpop.f32.mrb[0].mxu0
    %359 = vdwg.mxu0
    %vm360 = vcmask 64512
    %v361 = vsel %vm360, %v309, -inf
    %362 = vmax.xlane.f32.xlu0 %v361
    %v363 = vpop.xlane.xlu0 %362
    %v364 = vsel %vm360, %v355, -inf
    %365 = vmax.xlane.f32.xlu0 %v364
    %v366 = vpop.xlane.xlu0 %365
    %v367 = vsub.f32 %v309, %v363
    %v368 = vsub.f32 %v355, %v366
    %v369 = vmul.f32 %v367, 1.442695
    %v370 = vpow.pop %v369
    %v371 = vmul.f32 %v368, 1.442695
    %v372 = vpow.pop %v371
    %v373 = vsel %vm360, %v370, 0.0
    %374 = vadd.xlane.f32.xlu0 %v373
    %v375 = vpop.xlane.xlu0 %374
    %v376 = vsel %vm360, %v372, 0.0
    %377 = vadd.xlane.f32.xlu0 %v376
    %v378 = vpop.xlane.xlu0 %377
    %v379 = vrcp.pop %v375
    %v380 = vrcp.pop %v378
    %v381 = vmul.f32 %v370, %v379
    %v382 = vmul.f32 %v372, %v380
    %v383 = vpack.c.bf16 %v381, %v381
    %v384 = vpack.c.bf16 %v382, %v382
    %v386 = vsel %vm360, %v383, 0
    %vm388 = vcmask 1043456
    %v390 = vsel %vm388, %v266, 0
    %392 = vmatprep.subr.bf16.mxu0 0
    %393 = vmatpush1.bf16.msra.mxu0 %v390
    %394 = vmatprep.subr.bf16.mxu0 0
    %395 = vmatpush1.bf16.msra.mxu0 0
    %396 = vmatprep.subr.bf16.mxu0 0
    %397 = vmatpush1.bf16.msra.mxu0 0
    %398 = vmatprep.subr.bf16.mxu0 0
    %399 = vmatpush1.bf16.msra.mxu0 0
    %400 = vmatprep.subr.bf16.mxu0 0
    %401 = vmatpush1.bf16.msra.mxu0 0
    %402 = vmatprep.subr.bf16.mxu0 0
    %403 = vmatpush1.bf16.msra.mxu0 0
    %404 = vmatprep.subr.bf16.mxu0 0
    %405 = vmatpush1.bf16.msra.mxu0 0
    %406 = vmatprep.subr.bf16.mxu0 0
    %407 = vmatpush1.bf16.msra.mxu0 0
    %408 = vmatprep.subr.bf16.mxu0 0
    %409 = vmatpush1.bf16.msra.mxu0 0
    %410 = vmatprep.subr.bf16.mxu0 0
    %411 = vmatpush1.bf16.msra.mxu0 0
    %412 = vmatprep.subr.bf16.mxu0 0
    %413 = vmatpush1.bf16.msra.mxu0 0
    %414 = vmatprep.subr.bf16.mxu0 0
    %415 = vmatpush1.bf16.msra.mxu0 0
    %416 = vmatprep.subr.bf16.mxu0 0
    %417 = vmatpush1.bf16.msra.mxu0 0
    %418 = vmatprep.subr.bf16.mxu0 0
    %419 = vmatpush1.bf16.msra.mxu0 0
    %420 = vmatprep.subr.bf16.mxu0 0
    %421 = vmatpush1.bf16.msra.mxu0 0
    %422 = vmatprep.subr.bf16.mxu0 0
    %423 = vmatpush1.bf16.msra.mxu0 0
    %424 = vmatprep.mubr.bf16.mxu0 0
    %425 = vmatmul.mubr.bf16.gmra.mrb[0].mxu0 %v386
    %v426 = vpop.f32.mrb[0].mxu0
    %v427 = vadd.f32 0.0, %v426
    %v428 = vpop.f32.mrb[0].mxu0
    %v429 = vpop.f32.mrb[0].mxu0
    %v430 = vpop.f32.mrb[0].mxu0
    %431 = vdwg.mxu0
    %v433 = vsel %vm360, %v384, 0
    %v436 = vsel %vm388, %v267, 0
    %438 = vmatprep.subr.bf16.mxu0 0
    %439 = vmatpush1.bf16.msra.mxu0 %v436
    %440 = vmatprep.subr.bf16.mxu0 0
    %441 = vmatpush1.bf16.msra.mxu0 0
    %442 = vmatprep.subr.bf16.mxu0 0
    %443 = vmatpush1.bf16.msra.mxu0 0
    %444 = vmatprep.subr.bf16.mxu0 0
    %445 = vmatpush1.bf16.msra.mxu0 0
    %446 = vmatprep.subr.bf16.mxu0 0
    %447 = vmatpush1.bf16.msra.mxu0 0
    %448 = vmatprep.subr.bf16.mxu0 0
    %449 = vmatpush1.bf16.msra.mxu0 0
    %450 = vmatprep.subr.bf16.mxu0 0
    %451 = vmatpush1.bf16.msra.mxu0 0
    %452 = vmatprep.subr.bf16.mxu0 0
    %453 = vmatpush1.bf16.msra.mxu0 0
    %454 = vmatprep.subr.bf16.mxu0 0
    %455 = vmatpush1.bf16.msra.mxu0 0
    %456 = vmatprep.subr.bf16.mxu0 0
    %457 = vmatpush1.bf16.msra.mxu0 0
    %458 = vmatprep.subr.bf16.mxu0 0
    %459 = vmatpush1.bf16.msra.mxu0 0
    %460 = vmatprep.subr.bf16.mxu0 0
    %461 = vmatpush1.bf16.msra.mxu0 0
    %462 = vmatprep.subr.bf16.mxu0 0
    %463 = vmatpush1.bf16.msra.mxu0 0
    %464 = vmatprep.subr.bf16.mxu0 0
    %465 = vmatpush1.bf16.msra.mxu0 0
    %466 = vmatprep.subr.bf16.mxu0 0
    %467 = vmatpush1.bf16.msra.mxu0 0
    %468 = vmatprep.subr.bf16.mxu0 0
    %469 = vmatpush1.bf16.msra.mxu0 0
    %470 = vmatprep.mubr.bf16.mxu0 0
    %471 = vmatmul.mubr.bf16.gmra.mrb[0].mxu0 %v433
    %v472 = vpop.f32.mrb[0].mxu0
    %v473 = vadd.f32 0.0, %v472
    %v474 = vpop.f32.mrb[0].mxu0
    %v475 = vpop.f32.mrb[0].mxu0
    %v476 = vpop.f32.mrb[0].mxu0
    %477 = vdwg.mxu0
    %479 = vrot.lane.b32.xlu0 %v262, 96
    %v480 = vpop.permute.xlu0 %479
    %482 = vrot.lane.b32.xlu0 %v264, 96
    %v483 = vpop.permute.xlu0 %482
    %v485 = vsel %vm168, %v480, 0
    %v488 = vsel %vm168, %v483, 0
    %490 = vmatprep.subr.bf16.mxu0 0
    %491 = vmatpush1.bf16.xpose.msra.mxu0 %v488
    %492 = vmatprep.subr.bf16.mxu0 0
    %493 = vmatpush1.bf16.xpose.msra.mxu0 0
    %494 = vmatprep.subr.bf16.mxu0 0
    %495 = vmatpush1.bf16.xpose.msra.mxu0 0
    %496 = vmatprep.subr.bf16.mxu0 0
    %497 = vmatpush1.bf16.xpose.msra.mxu0 0
    %498 = vmatprep.subr.bf16.mxu0 0
    %499 = vmatpush1.bf16.xpose.msra.mxu0 0
    %500 = vmatprep.subr.bf16.mxu0 0
    %501 = vmatpush1.bf16.xpose.msra.mxu0 0
    %502 = vmatprep.subr.bf16.mxu0 0
    %503 = vmatpush1.bf16.xpose.msra.mxu0 0
    %504 = vmatprep.subr.bf16.mxu0 0
    %505 = vmatpush1.bf16.xpose.msra.mxu0 0
    %506 = vmatprep.subr.bf16.mxu0 0
    %507 = vmatpush1.bf16.xpose.msra.mxu0 0
    %508 = vmatprep.subr.bf16.mxu0 0
    %509 = vmatpush1.bf16.xpose.msra.mxu0 0
    %510 = vmatprep.subr.bf16.mxu0 0
    %511 = vmatpush1.bf16.xpose.msra.mxu0 0
    %512 = vmatprep.subr.bf16.mxu0 0
    %513 = vmatpush1.bf16.xpose.msra.mxu0 0
    %514 = vmatprep.subr.bf16.mxu0 0
    %515 = vmatpush1.bf16.xpose.msra.mxu0 0
    %516 = vmatprep.subr.bf16.mxu0 0
    %517 = vmatpush1.bf16.xpose.msra.mxu0 0
    %518 = vmatprep.subr.bf16.mxu0 0
    %519 = vmatpush1.bf16.xpose.msra.mxu0 0
    %520 = vmatprep.subr.bf16.mxu0 0
    %521 = vmatpush1.bf16.xpose.msra.mxu0 0
    %522 = vmatprep.mubr.bf16.mxu0 0
    %523 = vmatmul.mubr.bf16.gmra.mrb[0].mxu0 %v485
    %v524 = vpop.f32.mrb[0].mxu0
    %v525 = vadd.f32 0.0, %v524
    %v526 = vpop.f32.mrb[0].mxu0
    %v527 = vpop.f32.mrb[0].mxu0
    %v528 = vpop.f32.mrb[0].mxu0
    %529 = vdwg.mxu0
    %531 = vrot.lane.b32.xlu0 %v263, 96
    %v532 = vpop.permute.xlu0 %531
    %534 = vrot.lane.b32.xlu0 %v265, 96
    %v535 = vpop.permute.xlu0 %534
    %v537 = vsel %vm168, %v532, 0
    %v540 = vsel %vm168, %v535, 0
    %542 = vmatprep.subr.bf16.mxu0 0
    %543 = vmatpush1.bf16.xpose.msra.mxu0 %v540
    %544 = vmatprep.subr.bf16.mxu0 0
    %545 = vmatpush1.bf16.xpose.msra.mxu0 0
    %546 = vmatprep.subr.bf16.mxu0 0
    %547 = vmatpush1.bf16.xpose.msra.mxu0 0
    %548 = vmatprep.subr.bf16.mxu0 0
    %549 = vmatpush1.bf16.xpose.msra.mxu0 0
    %550 = vmatprep.subr.bf16.mxu0 0
    %551 = vmatpush1.bf16.xpose.msra.mxu0 0
    %552 = vmatprep.subr.bf16.mxu0 0
    %553 = vmatpush1.bf16.xpose.msra.mxu0 0
    %554 = vmatprep.subr.bf16.mxu0 0
    %555 = vmatpush1.bf16.xpose.msra.mxu0 0
    %556 = vmatprep.subr.bf16.mxu0 0
    %557 = vmatpush1.bf16.xpose.msra.mxu0 0
    %558 = vmatprep.subr.bf16.mxu0 0
    %559 = vmatpush1.bf16.xpose.msra.mxu0 0
    %560 = vmatprep.subr.bf16.mxu0 0
    %561 = vmatpush1.bf16.xpose.msra.mxu0 0
    %562 = vmatprep.subr.bf16.mxu0 0
    %563 = vmatpush1.bf16.xpose.msra.mxu0 0
    %564 = vmatprep.subr.bf16.mxu0 0
    %565 = vmatpush1.bf16.xpose.msra.mxu0 0
    %566 = vmatprep.subr.bf16.mxu0 0
    %567 = vmatpush1.bf16.xpose.msra.mxu0 0
    %568 = vmatprep.subr.bf16.mxu0 0
    %569 = vmatpush1.bf16.xpose.msra.mxu0 0
    %570 = vmatprep.subr.bf16.mxu0 0
    %571 = vmatpush1.bf16.xpose.msra.mxu0 0
    %572 = vmatprep.subr.bf16.mxu0 0
    %573 = vmatpush1.bf16.xpose.msra.mxu0 0
    %574 = vmatprep.mubr.bf16.mxu0 0
    %575 = vmatmul.mubr.bf16.gmra.mrb[0].mxu0 %v537
    %v576 = vpop.f32.mrb[0].mxu0
    %v577 = vadd.f32 0.0, %v576
    %v578 = vpop.f32.mrb[0].mxu0
    %v579 = vpop.f32.mrb[0].mxu0
    %v580 = vpop.f32.mrb[0].mxu0
    %581 = vdwg.mxu0
    %v582 = vsel %vm360, %v525, -inf
    %583 = vmax.xlane.f32.xlu0 %v582
    %v584 = vpop.xlane.xlu0 %583
    %v585 = vsel %vm360, %v577, -inf
    %586 = vmax.xlane.f32.xlu0 %v585
    %v587 = vpop.xlane.xlu0 %586
    %v588 = vsub.f32 %v525, %v584
    %v589 = vsub.f32 %v577, %v587
    %v590 = vmul.f32 %v588, 1.442695
    %v591 = vpow.pop %v590
    %v592 = vmul.f32 %v589, 1.442695
    %v593 = vpow.pop %v592
    %v594 = vsel %vm360, %v591, 0.0
    %595 = vadd.xlane.f32.xlu0 %v594
    %v596 = vpop.xlane.xlu0 %595
    %v597 = vsel %vm360, %v593, 0.0
    %598 = vadd.xlane.f32.xlu0 %v597
    %v599 = vpop.xlane.xlu0 %598
    %v600 = vrcp.pop %v596
    %v601 = vrcp.pop %v599
    %v602 = vmul.f32 %v591, %v600
    %v603 = vmul.f32 %v593, %v601
    %v604 = vpack.c.bf16 %v602, %v602
    %v605 = vpack.c.bf16 %v603, %v603
    %607 = vrot.lane.b32.xlu0 %v266, 96
    %v608 = vpop.permute.xlu0 %607
    %v610 = vsel %vm360, %v604, 0
    %v613 = vsel %vm388, %v608, 0
    %615 = vmatprep.subr.bf16.mxu0 0
    %616 = vmatpush1.bf16.msra.mxu0 %v613
    %617 = vmatprep.subr.bf16.mxu0 0
    %618 = vmatpush1.bf16.msra.mxu0 0
    %619 = vmatprep.subr.bf16.mxu0 0
    %620 = vmatpush1.bf16.msra.mxu0 0
    %621 = vmatprep.subr.bf16.mxu0 0
    %622 = vmatpush1.bf16.msra.mxu0 0
    %623 = vmatprep.subr.bf16.mxu0 0
    %624 = vmatpush1.bf16.msra.mxu0 0
    %625 = vmatprep.subr.bf16.mxu0 0
    %626 = vmatpush1.bf16.msra.mxu0 0
    %627 = vmatprep.subr.bf16.mxu0 0
    %628 = vmatpush1.bf16.msra.mxu0 0
    %629 = vmatprep.subr.bf16.mxu0 0
    %630 = vmatpush1.bf16.msra.mxu0 0
    %631 = vmatprep.subr.bf16.mxu0 0
    %632 = vmatpush1.bf16.msra.mxu0 0
    %633 = vmatprep.subr.bf16.mxu0 0
    %634 = vmatpush1.bf16.msra.mxu0 0
    %635 = vmatprep.subr.bf16.mxu0 0
    %636 = vmatpush1.bf16.msra.mxu0 0
    %637 = vmatprep.subr.bf16.mxu0 0
    %638 = vmatpush1.bf16.msra.mxu0 0
    %639 = vmatprep.subr.bf16.mxu0 0
    %640 = vmatpush1.bf16.msra.mxu0 0
    %641 = vmatprep.subr.bf16.mxu0 0
    %642 = vmatpush1.bf16.msra.mxu0 0
    %643 = vmatprep.subr.bf16.mxu0 0
    %644 = vmatpush1.bf16.msra.mxu0 0
    %645 = vmatprep.subr.bf16.mxu0 0
    %646 = vmatpush1.bf16.msra.mxu0 0
    %647 = vmatprep.mubr.bf16.mxu0 0
    %648 = vmatmul.mubr.bf16.gmra.mrb[0].mxu0 %v610
    %v649 = vpop.f32.mrb[0].mxu0
    %v650 = vadd.f32 0.0, %v649
    %v651 = vpop.f32.mrb[0].mxu0
    %v652 = vpop.f32.mrb[0].mxu0
    %v653 = vpop.f32.mrb[0].mxu0
    %654 = vdwg.mxu0
    %656 = vrot.lane.b32.xlu0 %v267, 96
    %v657 = vpop.permute.xlu0 %656
    %v659 = vsel %vm360, %v605, 0
    %v662 = vsel %vm388, %v657, 0
    %664 = vmatprep.subr.bf16.mxu0 0
    %665 = vmatpush1.bf16.msra.mxu0 %v662
    %666 = vmatprep.subr.bf16.mxu0 0
    %667 = vmatpush1.bf16.msra.mxu0 0
    %668 = vmatprep.subr.bf16.mxu0 0
    %669 = vmatpush1.bf16.msra.mxu0 0
    %670 = vmatprep.subr.bf16.mxu0 0
    %671 = vmatpush1.bf16.msra.mxu0 0
    %672 = vmatprep.subr.bf16.mxu0 0
    %673 = vmatpush1.bf16.msra.mxu0 0
    %674 = vmatprep.subr.bf16.mxu0 0
    %675 = vmatpush1.bf16.msra.mxu0 0
    %676 = vmatprep.subr.bf16.mxu0 0
    %677 = vmatpush1.bf16.msra.mxu0 0
    %678 = vmatprep.subr.bf16.mxu0 0
    %679 = vmatpush1.bf16.msra.mxu0 0
    %680 = vmatprep.subr.bf16.mxu0 0
    %681 = vmatpush1.bf16.msra.mxu0 0
    %682 = vmatprep.subr.bf16.mxu0 0
    %683 = vmatpush1.bf16.msra.mxu0 0
    %684 = vmatprep.subr.bf16.mxu0 0
    %685 = vmatpush1.bf16.msra.mxu0 0
    %686 = vmatprep.subr.bf16.mxu0 0
    %687 = vmatpush1.bf16.msra.mxu0 0
    %688 = vmatprep.subr.bf16.mxu0 0
    %689 = vmatpush1.bf16.msra.mxu0 0
    %690 = vmatprep.subr.bf16.mxu0 0
    %691 = vmatpush1.bf16.msra.mxu0 0
    %692 = vmatprep.subr.bf16.mxu0 0
    %693 = vmatpush1.bf16.msra.mxu0 0
    %694 = vmatprep.subr.bf16.mxu0 0
    %695 = vmatpush1.bf16.msra.mxu0 0
    %696 = vmatprep.mubr.bf16.mxu0 0
    %697 = vmatmul.mubr.bf16.gmra.mrb[0].mxu0 %v659
    %v698 = vpop.f32.mrb[0].mxu0
    %v699 = vadd.f32 0.0, %v698
    %v700 = vpop.f32.mrb[0].mxu0
    %v701 = vpop.f32.mrb[0].mxu0
    %v702 = vpop.f32.mrb[0].mxu0
    %703 = vdwg.mxu0
    %704 = vrot.lane.b32.xlu0 %v262, 64
    %v705 = vpop.permute.xlu0 %704
    %706 = vrot.lane.b32.xlu0 %v264, 64
    %v707 = vpop.permute.xlu0 %706
    %v709 = vsel %vm168, %v705, 0
    %v712 = vsel %vm168, %v707, 0
    %714 = vmatprep.subr.bf16.mxu0 0
    %715 = vmatpush1.bf16.xpose.msra.mxu0 %v712
    %716 = vmatprep.subr.bf16.mxu0 0
    %717 = vmatpush1.bf16.xpose.msra.mxu0 0
    %718 = vmatprep.subr.bf16.mxu0 0
    %719 = vmatpush1.bf16.xpose.msra.mxu0 0
    %720 = vmatprep.subr.bf16.mxu0 0
    %721 = vmatpush1.bf16.xpose.msra.mxu0 0
    %722 = vmatprep.subr.bf16.mxu0 0
    %723 = vmatpush1.bf16.xpose.msra.mxu0 0
    %724 = vmatprep.subr.bf16.mxu0 0
    %725 = vmatpush1.bf16.xpose.msra.mxu0 0
    %726 = vmatprep.subr.bf16.mxu0 0
    %727 = vmatpush1.bf16.xpose.msra.mxu0 0
    %728 = vmatprep.subr.bf16.mxu0 0
    %729 = vmatpush1.bf16.xpose.msra.mxu0 0
    %730 = vmatprep.subr.bf16.mxu0 0
    %731 = vmatpush1.bf16.xpose.msra.mxu0 0
    %732 = vmatprep.subr.bf16.mxu0 0
    %733 = vmatpush1.bf16.xpose.msra.mxu0 0
    %734 = vmatprep.subr.bf16.mxu0 0
    %735 = vmatpush1.bf16.xpose.msra.mxu0 0
    %736 = vmatprep.subr.bf16.mxu0 0
    %737 = vmatpush1.bf16.xpose.msra.mxu0 0
    %738 = vmatprep.subr.bf16.mxu0 0
    %739 = vmatpush1.bf16.xpose.msra.mxu0 0
    %740 = vmatprep.subr.bf16.mxu0 0
    %741 = vmatpush1.bf16.xpose.msra.mxu0 0
    %742 = vmatprep.subr.bf16.mxu0 0
    %743 = vmatpush1.bf16.xpose.msra.mxu0 0
    %744 = vmatprep.subr.bf16.mxu0 0
    %745 = vmatpush1.bf16.xpose.msra.mxu0 0
    %746 = vmatprep.mubr.bf16.mxu0 0
    %747 = vmatmul.mubr.bf16.gmra.mrb[0].mxu0 %v709
    %v748 = vpop.f32.mrb[0].mxu0
    %v749 = vadd.f32 0.0, %v748
    %v750 = vpop.f32.mrb[0].mxu0
    %v751 = vpop.f32.mrb[0].mxu0
    %v752 = vpop.f32.mrb[0].mxu0
    %753 = vdwg.mxu0
    %754 = vrot.lane.b32.xlu0 %v263, 64
    %v755 = vpop.permute.xlu0 %754
    %756 = vrot.lane.b32.xlu0 %v265, 64
    %v757 = vpop.permute.xlu0 %756
    %v759 = vsel %vm168, %v755, 0
    %v762 = vsel %vm168, %v757, 0
    %764 = vmatprep.subr.bf16.mxu0 0
    %765 = vmatpush1.bf16.xpose.msra.mxu0 %v762
    %766 = vmatprep.subr.bf16.mxu0 0
    %767 = vmatpush1.bf16.xpose.msra.mxu0 0
    %768 = vmatprep.subr.bf16.mxu0 0
    %769 = vmatpush1.bf16.xpose.msra.mxu0 0
    %770 = vmatprep.subr.bf16.mxu0 0
    %771 = vmatpush1.bf16.xpose.msra.mxu0 0
    %772 = vmatprep.subr.bf16.mxu0 0
    %773 = vmatpush1.bf16.xpose.msra.mxu0 0
    %774 = vmatprep.subr.bf16.mxu0 0
    %775 = vmatpush1.bf16.xpose.msra.mxu0 0
    %776 = vmatprep.subr.bf16.mxu0 0
    %777 = vmatpush1.bf16.xpose.msra.mxu0 0
    %778 = vmatprep.subr.bf16.mxu0 0
    %779 = vmatpush1.bf16.xpose.msra.mxu0 0
    %780 = vmatprep.subr.bf16.mxu0 0
    %781 = vmatpush1.bf16.xpose.msra.mxu0 0
    %782 = vmatprep.subr.bf16.mxu0 0
    %783 = vmatpush1.bf16.xpose.msra.mxu0 0
    %784 = vmatprep.subr.bf16.mxu0 0
    %785 = vmatpush1.bf16.xpose.msra.mxu0 0
    %786 = vmatprep.subr.bf16.mxu0 0
    %787 = vmatpush1.bf16.xpose.msra.mxu0 0
    %788 = vmatprep.subr.bf16.mxu0 0
    %789 = vmatpush1.bf16.xpose.msra.mxu0 0
    %790 = vmatprep.subr.bf16.mxu0 0
    %791 = vmatpush1.bf16.xpose.msra.mxu0 0
    %792 = vmatprep.subr.bf16.mxu0 0
    %793 = vmatpush1.bf16.xpose.msra.mxu0 0
    %794 = vmatprep.subr.bf16.mxu0 0
    %795 = vmatpush1.bf16.xpose.msra.mxu0 0
    %796 = vmatprep.mubr.bf16.mxu0 0
    %797 = vmatmul.mubr.bf16.gmra.mrb[0].mxu0 %v759
    %v798 = vpop.f32.mrb[0].mxu0
    %v799 = vadd.f32 0.0, %v798
    %v800 = vpop.f32.mrb[0].mxu0
    %v801 = vpop.f32.mrb[0].mxu0
    %v802 = vpop.f32.mrb[0].mxu0
    %803 = vdwg.mxu0
    %v804 = vsel %vm360, %v749, -inf
    %805 = vmax.xlane.f32.xlu0 %v804
    %v806 = vpop.xlane.xlu0 %805
    %v807 = vsel %vm360, %v799, -inf
    %808 = vmax.xlane.f32.xlu0 %v807
    %v809 = vpop.xlane.xlu0 %808
    %v810 = vsub.f32 %v749, %v806
    %v811 = vsub.f32 %v799, %v809
    %v812 = vmul.f32 %v810, 1.442695
    %v813 = vpow.pop %v812
    %v814 = vmul.f32 %v811, 1.442695
    %v815 = vpow.pop %v814
    %v816 = vsel %vm360, %v813, 0.0
    %817 = vadd.xlane.f32.xlu0 %v816
    %v818 = vpop.xlane.xlu0 %817
    %v819 = vsel %vm360, %v815, 0.0
    %820 = vadd.xlane.f32.xlu0 %v819
    %v821 = vpop.xlane.xlu0 %820
    %v822 = vrcp.pop %v818
    %v823 = vrcp.pop %v821
    %v824 = vmul.f32 %v813, %v822
    %v825 = vmul.f32 %v815, %v823
    %v826 = vpack.c.bf16 %v824, %v824
    %v827 = vpack.c.bf16 %v825, %v825
    %828 = vrot.lane.b32.xlu0 %v266, 64
    %v829 = vpop.permute.xlu0 %828
    %v831 = vsel %vm360, %v826, 0
    %v834 = vsel %vm388, %v829, 0
    %836 = vmatprep.subr.bf16.mxu0 0
    %837 = vmatpush1.bf16.msra.mxu0 %v834
    %838 = vmatprep.subr.bf16.mxu0 0
    %839 = vmatpush1.bf16.msra.mxu0 0
    %840 = vmatprep.subr.bf16.mxu0 0
    %841 = vmatpush1.bf16.msra.mxu0 0
    %842 = vmatprep.subr.bf16.mxu0 0
    %843 = vmatpush1.bf16.msra.mxu0 0
    %844 = vmatprep.subr.bf16.mxu0 0
    %845 = vmatpush1.bf16.msra.mxu0 0
    %846 = vmatprep.subr.bf16.mxu0 0
    %847 = vmatpush1.bf16.msra.mxu0 0
    %848 = vmatprep.subr.bf16.mxu0 0
    %849 = vmatpush1.bf16.msra.mxu0 0
    %850 = vmatprep.subr.bf16.mxu0 0
    %851 = vmatpush1.bf16.msra.mxu0 0
    %852 = vmatprep.subr.bf16.mxu0 0
    %853 = vmatpush1.bf16.msra.mxu0 0
    %854 = vmatprep.subr.bf16.mxu0 0
    %855 = vmatpush1.bf16.msra.mxu0 0
    %856 = vmatprep.subr.bf16.mxu0 0
    %857 = vmatpush1.bf16.msra.mxu0 0
    %858 = vmatprep.subr.bf16.mxu0 0
    %859 = vmatpush1.bf16.msra.mxu0 0
    %860 = vmatprep.subr.bf16.mxu0 0
    %861 = vmatpush1.bf16.msra.mxu0 0
    %862 = vmatprep.subr.bf16.mxu0 0
    %863 = vmatpush1.bf16.msra.mxu0 0
    %864 = vmatprep.subr.bf16.mxu0 0
    %865 = vmatpush1.bf16.msra.mxu0 0
    %866 = vmatprep.subr.bf16.mxu0 0
    %867 = vmatpush1.bf16.msra.mxu0 0
    %868 = vmatprep.mubr.bf16.mxu0 0
    %869 = vmatmul.mubr.bf16.gmra.mrb[0].mxu0 %v831
    %v870 = vpop.f32.mrb[0].mxu0
    %v871 = vadd.f32 0.0, %v870
    %v872 = vpop.f32.mrb[0].mxu0
    %v873 = vpop.f32.mrb[0].mxu0
    %v874 = vpop.f32.mrb[0].mxu0
    %875 = vdwg.mxu0
    %876 = vrot.lane.b32.xlu0 %v267, 64
    %v877 = vpop.permute.xlu0 %876
    %v879 = vsel %vm360, %v827, 0
    %v882 = vsel %vm388, %v877, 0
    %884 = vmatprep.subr.bf16.mxu0 0
    %885 = vmatpush1.bf16.msra.mxu0 %v882
    %886 = vmatprep.subr.bf16.mxu0 0
    %887 = vmatpush1.bf16.msra.mxu0 0
    %888 = vmatprep.subr.bf16.mxu0 0
    %889 = vmatpush1.bf16.msra.mxu0 0
    %890 = vmatprep.subr.bf16.mxu0 0
    %891 = vmatpush1.bf16.msra.mxu0 0
    %892 = vmatprep.subr.bf16.mxu0 0
    %893 = vmatpush1.bf16.msra.mxu0 0
    %894 = vmatprep.subr.bf16.mxu0 0
    %895 = vmatpush1.bf16.msra.mxu0 0
    %896 = vmatprep.subr.bf16.mxu0 0
    %897 = vmatpush1.bf16.msra.mxu0 0
    %898 = vmatprep.subr.bf16.mxu0 0
    %899 = vmatpush1.bf16.msra.mxu0 0
    %900 = vmatprep.subr.bf16.mxu0 0
    %901 = vmatpush1.bf16.msra.mxu0 0
    %902 = vmatprep.subr.bf16.mxu0 0
    %903 = vmatpush1.bf16.msra.mxu0 0
    %904 = vmatprep.subr.bf16.mxu0 0
    %905 = vmatpush1.bf16.msra.mxu0 0
    %906 = vmatprep.subr.bf16.mxu0 0
    %907 = vmatpush1.bf16.msra.mxu0 0
    %908 = vmatprep.subr.bf16.mxu0 0
    %909 = vmatpush1.bf16.msra.mxu0 0
    %910 = vmatprep.subr.bf16.mxu0 0
    %911 = vmatpush1.bf16.msra.mxu0 0
    %912 = vmatprep.subr.bf16.mxu0 0
    %913 = vmatpush1.bf16.msra.mxu0 0
    %914 = vmatprep.subr.bf16.mxu0 0
    %915 = vmatpush1.bf16.msra.mxu0 0
    %916 = vmatprep.mubr.bf16.mxu0 0
    %917 = vmatmul.mubr.bf16.gmra.mrb[0].mxu0 %v879
    %v918 = vpop.f32.mrb[0].mxu0
    %v919 = vadd.f32 0.0, %v918
    %v920 = vpop.f32.mrb[0].mxu0
    %v921 = vpop.f32.mrb[0].mxu0
    %v922 = vpop.f32.mrb[0].mxu0
    %923 = vdwg.mxu0
    %924 = vrot.lane.b32.xlu0 %v262, 32
    %v925 = vpop.permute.xlu0 %924
    %926 = vrot.lane.b32.xlu0 %v264, 32
    %v927 = vpop.permute.xlu0 %926
    %v929 = vsel %vm168, %v925, 0
    %v932 = vsel %vm168, %v927, 0
    %934 = vmatprep.subr.bf16.mxu0 0
    %935 = vmatpush1.bf16.xpose.msra.mxu0 %v932
    %936 = vmatprep.subr.bf16.mxu0 0
    %937 = vmatpush1.bf16.xpose.msra.mxu0 0
    %938 = vmatprep.subr.bf16.mxu0 0
    %939 = vmatpush1.bf16.xpose.msra.mxu0 0
    %940 = vmatprep.subr.bf16.mxu0 0
    %941 = vmatpush1.bf16.xpose.msra.mxu0 0
    %942 = vmatprep.subr.bf16.mxu0 0
    %943 = vmatpush1.bf16.xpose.msra.mxu0 0
    %944 = vmatprep.subr.bf16.mxu0 0
    %945 = vmatpush1.bf16.xpose.msra.mxu0 0
    %946 = vmatprep.subr.bf16.mxu0 0
    %947 = vmatpush1.bf16.xpose.msra.mxu0 0
    %948 = vmatprep.subr.bf16.mxu0 0
    %949 = vmatpush1.bf16.xpose.msra.mxu0 0
    %950 = vmatprep.subr.bf16.mxu0 0
    %951 = vmatpush1.bf16.xpose.msra.mxu0 0
    %952 = vmatprep.subr.bf16.mxu0 0
    %953 = vmatpush1.bf16.xpose.msra.mxu0 0
    %954 = vmatprep.subr.bf16.mxu0 0
    %955 = vmatpush1.bf16.xpose.msra.mxu0 0
    %956 = vmatprep.subr.bf16.mxu0 0
    %957 = vmatpush1.bf16.xpose.msra.mxu0 0
    %958 = vmatprep.subr.bf16.mxu0 0
    %959 = vmatpush1.bf16.xpose.msra.mxu0 0
    %960 = vmatprep.subr.bf16.mxu0 0
    %961 = vmatpush1.bf16.xpose.msra.mxu0 0
    %962 = vmatprep.subr.bf16.mxu0 0
    %963 = vmatpush1.bf16.xpose.msra.mxu0 0
    %964 = vmatprep.subr.bf16.mxu0 0
    %965 = vmatpush1.bf16.xpose.msra.mxu0 0
    %966 = vmatprep.mubr.bf16.mxu0 0
    %967 = vmatmul.mubr.bf16.gmra.mrb[0].mxu0 %v929
    %v968 = vpop.f32.mrb[0].mxu0
    %v969 = vadd.f32 0.0, %v968
    %v970 = vpop.f32.mrb[0].mxu0
    %v971 = vpop.f32.mrb[0].mxu0
    %v972 = vpop.f32.mrb[0].mxu0
    %973 = vdwg.mxu0
    %974 = vrot.lane.b32.xlu0 %v263, 32
    %v975 = vpop.permute.xlu0 %974
    %976 = vrot.lane.b32.xlu0 %v265, 32
    %v977 = vpop.permute.xlu0 %976
    %v979 = vsel %vm168, %v975, 0
    %v982 = vsel %vm168, %v977, 0
    %984 = vmatprep.subr.bf16.mxu0 0
    %985 = vmatpush1.bf16.xpose.msra.mxu0 %v982
    %986 = vmatprep.subr.bf16.mxu0 0
    %987 = vmatpush1.bf16.xpose.msra.mxu0 0
    %988 = vmatprep.subr.bf16.mxu0 0
    %989 = vmatpush1.bf16.xpose.msra.mxu0 0
    %990 = vmatprep.subr.bf16.mxu0 0
    %991 = vmatpush1.bf16.xpose.msra.mxu0 0
    %992 = vmatprep.subr.bf16.mxu0 0
    %993 = vmatpush1.bf16.xpose.msra.mxu0 0
    %994 = vmatprep.subr.bf16.mxu0 0
    %995 = vmatpush1.bf16.xpose.msra.mxu0 0
    %996 = vmatprep.subr.bf16.mxu0 0
    %997 = vmatpush1.bf16.xpose.msra.mxu0 0
    %998 = vmatprep.subr.bf16.mxu0 0
    %999 = vmatpush1.bf16.xpose.msra.mxu0 0
    %1000 = vmatprep.subr.bf16.mxu0 0
    %1001 = vmatpush1.bf16.xpose.msra.mxu0 0
    %1002 = vmatprep.subr.bf16.mxu0 0
    %1003 = vmatpush1.bf16.xpose.msra.mxu0 0
    %1004 = vmatprep.subr.bf16.mxu0 0
    %1005 = vmatpush1.bf16.xpose.msra.mxu0 0
    %1006 = vmatprep.subr.bf16.mxu0 0
    %1007 = vmatpush1.bf16.xpose.msra.mxu0 0
    %1008 = vmatprep.subr.bf16.mxu0 0
    %1009 = vmatpush1.bf16.xpose.msra.mxu0 0
    %1010 = vmatprep.subr.bf16.mxu0 0
    %1011 = vmatpush1.bf16.xpose.msra.mxu0 0
    %1012 = vmatprep.subr.bf16.mxu0 0
    %1013 = vmatpush1.bf16.xpose.msra.mxu0 0
    %1014 = vmatprep.subr.bf16.mxu0 0
    %1015 = vmatpush1.bf16.xpose.msra.mxu0 0
    %1016 = vmatprep.mubr.bf16.mxu0 0
    %1017 = vmatmul.mubr.bf16.gmra.mrb[0].mxu0 %v979
    %v1018 = vpop.f32.mrb[0].mxu0
    %v1019 = vadd.f32 0.0, %v1018
    %v1020 = vpop.f32.mrb[0].mxu0
    %v1021 = vpop.f32.mrb[0].mxu0
    %v1022 = vpop.f32.mrb[0].mxu0
    %1023 = vdwg.mxu0
    %v1024 = vsel %vm360, %v969, -inf
    %1025 = vmax.xlane.f32.xlu0 %v1024
    %v1026 = vpop.xlane.xlu0 %1025
    %v1027 = vsel %vm360, %v1019, -inf
    %1028 = vmax.xlane.f32.xlu0 %v1027
    %v1029 = vpop.xlane.xlu0 %1028
    %v1030 = vsub.f32 %v969, %v1026
    %v1031 = vsub.f32 %v1019, %v1029
    %v1032 = vmul.f32 %v1030, 1.442695
    %v1033 = vpow.pop %v1032
    %v1034 = vmul.f32 %v1031, 1.442695
    %v1035 = vpow.pop %v1034
    %v1036 = vsel %vm360, %v1033, 0.0
    %1037 = vadd.xlane.f32.xlu0 %v1036
    %v1038 = vpop.xlane.xlu0 %1037
    %v1039 = vsel %vm360, %v1035, 0.0
    %1040 = vadd.xlane.f32.xlu0 %v1039
    %v1041 = vpop.xlane.xlu0 %1040
    %v1042 = vrcp.pop %v1038
    %v1043 = vrcp.pop %v1041
    %v1044 = vmul.f32 %v1033, %v1042
    %v1045 = vmul.f32 %v1035, %v1043
    %v1046 = vpack.c.bf16 %v1044, %v1044
    %v1047 = vpack.c.bf16 %v1045, %v1045
    %1048 = vrot.lane.b32.xlu0 %v266, 32
    %v1049 = vpop.permute.xlu0 %1048
    %v1051 = vsel %vm360, %v1046, 0
    %v1054 = vsel %vm388, %v1049, 0
    %1056 = vmatprep.subr.bf16.mxu0 0
    %1057 = vmatpush1.bf16.msra.mxu0 %v1054
    %1058 = vmatprep.subr.bf16.mxu0 0
    %1059 = vmatpush1.bf16.msra.mxu0 0
    %1060 = vmatprep.subr.bf16.mxu0 0
    %1061 = vmatpush1.bf16.msra.mxu0 0
    %1062 = vmatprep.subr.bf16.mxu0 0
    %1063 = vmatpush1.bf16.msra.mxu0 0
    %1064 = vmatprep.subr.bf16.mxu0 0
    %1065 = vmatpush1.bf16.msra.mxu0 0
    %1066 = vmatprep.subr.bf16.mxu0 0
    %1067 = vmatpush1.bf16.msra.mxu0 0
    %1068 = vmatprep.subr.bf16.mxu0 0
    %1069 = vmatpush1.bf16.msra.mxu0 0
    %1070 = vmatprep.subr.bf16.mxu0 0
    %1071 = vmatpush1.bf16.msra.mxu0 0
    %1072 = vmatprep.subr.bf16.mxu0 0
    %1073 = vmatpush1.bf16.msra.mxu0 0
    %1074 = vmatprep.subr.bf16.mxu0 0
    %1075 = vmatpush1.bf16.msra.mxu0 0
    %1076 = vmatprep.subr.bf16.mxu0 0
    %1077 = vmatpush1.bf16.msra.mxu0 0
    %1078 = vmatprep.subr.bf16.mxu0 0
    %1079 = vmatpush1.bf16.msra.mxu0 0
    %1080 = vmatprep.subr.bf16.mxu0 0
    %1081 = vmatpush1.bf16.msra.mxu0 0
    %1082 = vmatprep.subr.bf16.mxu0 0
    %1083 = vmatpush1.bf16.msra.mxu0 0
    %1084 = vmatprep.subr.bf16.mxu0 0
    %1085 = vmatpush1.bf16.msra.mxu0 0
    %1086 = vmatprep.subr.bf16.mxu0 0
    %1087 = vmatpush1.bf16.msra.mxu0 0
    %1088 = vmatprep.mubr.bf16.mxu0 0
    %1089 = vmatmul.mubr.bf16.gmra.mrb[0].mxu0 %v1051
    %v1090 = vpop.f32.mrb[0].mxu0
    %v1091 = vadd.f32 0.0, %v1090
    %v1092 = vpop.f32.mrb[0].mxu0
    %v1093 = vpop.f32.mrb[0].mxu0
    %v1094 = vpop.f32.mrb[0].mxu0
    %1095 = vdwg.mxu0
    %1096 = vrot.lane.b32.xlu0 %v267, 32
    %v1097 = vpop.permute.xlu0 %1096
    %v1099 = vsel %vm360, %v1047, 0
    %v1102 = vsel %vm388, %v1097, 0
    %1104 = vmatprep.subr.bf16.mxu0 0
    %1105 = vmatpush1.bf16.msra.mxu0 %v1102
    %1106 = vmatprep.subr.bf16.mxu0 0
    %1107 = vmatpush1.bf16.msra.mxu0 0
    %1108 = vmatprep.subr.bf16.mxu0 0
    %1109 = vmatpush1.bf16.msra.mxu0 0
    %1110 = vmatprep.subr.bf16.mxu0 0
    %1111 = vmatpush1.bf16.msra.mxu0 0
    %1112 = vmatprep.subr.bf16.mxu0 0
    %1113 = vmatpush1.bf16.msra.mxu0 0
    %1114 = vmatprep.subr.bf16.mxu0 0
    %1115 = vmatpush1.bf16.msra.mxu0 0
    %1116 = vmatprep.subr.bf16.mxu0 0
    %1117 = vmatpush1.bf16.msra.mxu0 0
    %1118 = vmatprep.subr.bf16.mxu0 0
    %1119 = vmatpush1.bf16.msra.mxu0 0
    %1120 = vmatprep.subr.bf16.mxu0 0
    %1121 = vmatpush1.bf16.msra.mxu0 0
    %1122 = vmatprep.subr.bf16.mxu0 0
    %1123 = vmatpush1.bf16.msra.mxu0 0
    %1124 = vmatprep.subr.bf16.mxu0 0
    %1125 = vmatpush1.bf16.msra.mxu0 0
    %1126 = vmatprep.subr.bf16.mxu0 0
    %1127 = vmatpush1.bf16.msra.mxu0 0
    %1128 = vmatprep.subr.bf16.mxu0 0
    %1129 = vmatpush1.bf16.msra.mxu0 0
    %1130 = vmatprep.subr.bf16.mxu0 0
    %1131 = vmatpush1.bf16.msra.mxu0 0
    %1132 = vmatprep.subr.bf16.mxu0 0
    %1133 = vmatpush1.bf16.msra.mxu0 0
    %1134 = vmatprep.subr.bf16.mxu0 0
    %1135 = vmatpush1.bf16.msra.mxu0 0
    %1136 = vmatprep.mubr.bf16.mxu0 0
    %1137 = vmatmul.mubr.bf16.gmra.mrb[0].mxu0 %v1099
    %v1138 = vpop.f32.mrb[0].mxu0
    %v1139 = vadd.f32 0.0, %v1138
    %v1140 = vpop.f32.mrb[0].mxu0
    %v1141 = vpop.f32.mrb[0].mxu0
    %v1142 = vpop.f32.mrb[0].mxu0
    %1143 = vdwg.mxu0
    %1146 = vrot.lane.b32.xlu0 %v650, 32
    %v1147 = vpop.permute.xlu0 %1146
    %1148 = vrot.lane.b32.xlu0 %v699, 32
    %v1149 = vpop.permute.xlu0 %1148
    %1154 = vrot.lane.b32.xlu0 %v871, 64
    %v1155 = vpop.permute.xlu0 %1154
    %1156 = vrot.lane.b32.xlu0 %v919, 64
    %v1157 = vpop.permute.xlu0 %1156
    %1162 = vrot.lane.b32.xlu0 %v1091, 96
    %v1163 = vpop.permute.xlu0 %1162
    %1164 = vrot.lane.b32.xlu0 %v1139, 96
    %v1165 = vpop.permute.xlu0 %1164
    %v1168 = vsel %vm168, %v427, %v1147
    %v1169 = vsel %vm168, %v473, %v1149
    %vm1170 = vcmask 523264
    %v1171 = vsel %vm1170, %v1168, %v1155
    %v1172 = vsel %vm1170, %v1169, %v1157
    %vm1173 = vcmask 785408
    %v1174 = vsel %vm1173, %v1171, %v1163
    %v1175 = vsel %vm1173, %v1172, %v1165
    %v1176 = vpack.c.bf16 %v1175, %v1174
    %v1177 = vld [vmem:[#allocation7] sm:$0xf]
    %v1178 = vld [vmem:[#allocation7 + $0x4] sm:$0xf]
    %v1179 = vld [vmem:[#allocation7 + $0x8] sm:$0xf]
    %v1180 = vld [vmem:[#allocation7 + $0xc] sm:$0xf]
    %v1181 = vld [vmem:[#allocation7 + $0x10] sm:$0xf]
    %v1182 = vld [vmem:[#allocation7 + $0x14] sm:$0xf]
    %v1183 = vld [vmem:[#allocation7 + $0x18] sm:$0xf]
    %v1184 = vld [vmem:[#allocation7 + $0x1c] sm:$0xf]
    %v1185 = vld [vmem:[#allocation7 + $0x20] sm:$0xf]
    %v1186 = vld [vmem:[#allocation7 + $0x24] sm:$0xf]
    %v1187 = vld [vmem:[#allocation7 + $0x28] sm:$0xf]
    %v1188 = vld [vmem:[#allocation7 + $0x2c] sm:$0xf]
    %v1189 = vld [vmem:[#allocation7 + $0x30] sm:$0xf]
    %v1190 = vld [vmem:[#allocation7 + $0x34] sm:$0xf]
    %v1191 = vld [vmem:[#allocation7 + $0x38] sm:$0xf]
    %v1192 = vld [vmem:[#allocation7 + $0x3c] sm:$0xf]
    %v1193 = vlaneseq
    %v1194 = vshrl.u32 %v1193, 7
    %v1195 = vsub.s32 0, %v1194
    %v1196 = vrot.slane %v256, %v1195
    %v1213 = vunpack.c.l.b16 %v1177
    %v1214 = vunpack.c.l.b16 %v1178
    %v1215 = vunpack.c.l.b16 %v1179
    %v1216 = vunpack.c.l.b16 %v1180
    %v1217 = vunpack.c.l.b16 %v1181
    %v1218 = vunpack.c.l.b16 %v1182
    %v1219 = vunpack.c.l.b16 %v1183
    %v1220 = vunpack.c.l.b16 %v1184
    %v1221 = vunpack.c.l.b16 %v1185
    %v1222 = vunpack.c.l.b16 %v1186
    %v1223 = vunpack.c.l.b16 %v1187
    %v1224 = vunpack.c.l.b16 %v1188
    %v1225 = vunpack.c.l.b16 %v1189
    %v1226 = vunpack.c.l.b16 %v1190
    %v1227 = vunpack.c.l.b16 %v1191
    %v1228 = vunpack.c.l.b16 %v1192
    %v1229 = vpack.c.b16 %v1214, %v1213
    %v1230 = vpack.c.b16 %v1216, %v1215
    %v1231 = vpack.c.b16 %v1218, %v1217
    %v1232 = vpack.c.b16 %v1220, %v1219
    %v1233 = vpack.c.b16 %v1222, %v1221
    %v1234 = vpack.c.b16 %v1224, %v1223
    %v1235 = vpack.c.b16 %v1226, %v1225
    %v1236 = vpack.c.b16 %v1228, %v1227
    %1245 = vmatprep.subr.bf16.mxu0 0
    %1246 = vmatpush1.bf16.msra.mxu0 %v1229
    %1247 = vmatprep.subr.bf16.mxu0 0
    %1248 = vmatpush1.bf16.msra.mxu0 %v1230
    %1249 = vmatprep.subr.bf16.mxu0 0
    %1250 = vmatpush1.bf16.msra.mxu0 %v1231
    %1251 = vmatprep.subr.bf16.mxu0 0
    %1252 = vmatpush1.bf16.msra.mxu0 %v1232
    %1253 = vmatprep.subr.bf16.mxu0 0
    %1254 = vmatpush1.bf16.msra.mxu0 %v1233
    %1255 = vmatprep.subr.bf16.mxu0 0
    %1256 = vmatpush1.bf16.msra.mxu0 %v1234
    %1257 = vmatprep.subr.bf16.mxu0 0
    %1258 = vmatpush1.bf16.msra.mxu0 %v1235
    %1259 = vmatprep.subr.bf16.mxu0 0
    %1260 = vmatpush1.bf16.msra.mxu0 %v1236
    %1261 = vmatprep.subr.bf16.mxu0 0
    %1262 = vmatpush1.bf16.msra.mxu0 0
    %1263 = vmatprep.subr.bf16.mxu0 0
    %1264 = vmatpush1.bf16.msra.mxu0 0
    %1265 = vmatprep.subr.bf16.mxu0 0
    %1266 = vmatpush1.bf16.msra.mxu0 0
    %1267 = vmatprep.subr.bf16.mxu0 0
    %1268 = vmatpush1.bf16.msra.mxu0 0
    %1269 = vmatprep.subr.bf16.mxu0 0
    %1270 = vmatpush1.bf16.msra.mxu0 0
    %1271 = vmatprep.subr.bf16.mxu0 0
    %1272 = vmatpush1.bf16.msra.mxu0 0
    %1273 = vmatprep.subr.bf16.mxu0 0
    %1274 = vmatpush1.bf16.msra.mxu0 0
    %1275 = vmatprep.subr.bf16.mxu0 0
    %1276 = vmatpush1.bf16.msra.mxu0 0
    %1277 = vmatprep.mubr.bf16.mxu0 0
    %1278 = vmatmul.mubr.bf16.gmra.mrb[0].mxu0 %v1176
    %v1279 = vpop.f32.mrb[0].mxu0
    %v1280 = vadd.f32 %v1196, %v1279
    %v1281 = vpop.f32.mrb[0].mxu0
    %v1282 = vpop.f32.mrb[0].mxu0
    %v1283 = vadd.f32 %v1196, %v1282
    %v1284 = vpop.f32.mrb[0].mxu0
    %1285 = vdwg.mxu0
    %v1286 = vadd.f32 %v1280, %v121
    %v1287 = vadd.f32 %v1283, %v122
    %v1288 = vsel %vm168, %v1286, 0.0
    %1289 = vadd.xlane.f32.xlu0 %v1288
    %v1290 = vpop.xlane.xlu0 %1289
    %v1291 = vsel %vm168, %v1287, 0.0
    %1292 = vadd.xlane.f32.xlu0 %v1291
    %v1293 = vpop.xlane.xlu0 %1292
    %v1294 = vrcp.pop 32.0
    %v1295 = vmul.f32 %v1290, %v1294
    %v1296 = vmul.f32 %v1293, %v1294
    %v1297 = vsub.f32 %v1286, %v1295
    %v1298 = vsub.f32 %v1287, %v1296
    %v1299 = vmul.f32 %v1297, %v1297
    %v1300 = vmul.f32 %v1298, %v1298
    %v1301 = vsel %vm168, %v1299, 0.0
    %1302 = vadd.xlane.f32.xlu0 %v1301
    %v1303 = vpop.xlane.xlu0 %1302
    %v1304 = vsel %vm168, %v1300, 0.0
    %1305 = vadd.xlane.f32.xlu0 %v1304
    %v1306 = vpop.xlane.xlu0 %1305
    %v1307 = vmul.f32 %v1303, %v1294
    %v1308 = vmul.f32 %v1306, %v1294
    %v1309 = vadd.f32 %v1307, 1e-05
    %v1310 = vadd.f32 %v1308, 1e-05
    %v1311 = vrsqrt.pop %v1309
    %v1312 = vrsqrt.pop %v1310
    %v1313 = vmul.f32 %v1297, %v1311
    %v1314 = vmul.f32 %v1298, %v1312
    %v1315 = vlaneseq
    %v1316 = vshrl.u32 %v1315, 7
    %v1317 = vsub.s32 0, %v1316
    %v1318 = vrot.slane %v257, %v1317
    %v1319 = vmul.f32 %v1313, %v1318
    %v1320 = vmul.f32 %v1314, %v1318
    %v1321 = vlaneseq
    %v1322 = vshrl.u32 %v1321, 7
    %v1323 = vsub.s32 0, %v1322
    %v1324 = vrot.slane %v258, %v1323
    %v1325 = vadd.f32 %v1319, %v1324
    %v1326 = vadd.f32 %v1320, %v1324
    %v1327 = vpack.c.bf16 %v1326, %v1325
    %v1328 = vld [vmem:[#allocation8] sm:$0xf]
    %v1329 = vld [vmem:[#allocation8 + $0x4] sm:$0xf]
    %v1330 = vld [vmem:[#allocation8 + $0x8] sm:$0xf]
    %v1331 = vld [vmem:[#allocation8 + $0xc] sm:$0xf]
    %v1332 = vld [vmem:[#allocation13] sm:$0x1]
    %v1334 = vlaneseq
    %v1335 = vshrl.u32 %v1334, 7
    %v1336 = vsub.s32 0, %v1335
    %v1337 = vrot.slane %v1332, %v1336
    %v1343 = vunpack.c.l.b16 %v1328
    %v1344 = vunpack.c.l.b16 %v1329
    %v1345 = vunpack.c.l.b16 %v1330
    %v1346 = vunpack.c.l.b16 %v1331
    %v1347 = vpack.c.b16 %v1344, %v1343
    %v1348 = vpack.c.b16 %v1346, %v1345
    %v1352 = vsel %vm168, %v1327, 0
    %1354 = vmatprep.subr.bf16.mxu0 0
    %1355 = vmatpush1.bf16.msra.mxu0 %v1347
    %1356 = vmatprep.subr.bf16.mxu0 0
    %1357 = vmatpush1.bf16.msra.mxu0 %v1348
    %1358 = vmatprep.subr.bf16.mxu0 0
    %1359 = vmatpush1.bf16.msra.mxu0 0
    %1360 = vmatprep.subr.bf16.mxu0 0
    %1361 = vmatpush1.bf16.msra.mxu0 0
    %1362 = vmatprep.subr.bf16.mxu0 0
    %1363 = vmatpush1.bf16.msra.mxu0 0
    %1364 = vmatprep.subr.bf16.mxu0 0
    %1365 = vmatpush1.bf16.msra.mxu0 0
    %1366 = vmatprep.subr.bf16.mxu0 0
    %1367 = vmatpush1.bf16.msra.mxu0 0
    %1368 = vmatprep.subr.bf16.mxu0 0
    %1369 = vmatpush1.bf16.msra.mxu0 0
    %1370 = vmatprep.subr.bf16.mxu0 0
    %1371 = vmatpush1.bf16.msra.mxu0 0
    %1372 = vmatprep.subr.bf16.mxu0 0
    %1373 = vmatpush1.bf16.msra.mxu0 0
    %1374 = vmatprep.subr.bf16.mxu0 0
    %1375 = vmatpush1.bf16.msra.mxu0 0
    %1376 = vmatprep.subr.bf16.mxu0 0
    %1377 = vmatpush1.bf16.msra.mxu0 0
    %1378 = vmatprep.subr.bf16.mxu0 0
    %1379 = vmatpush1.bf16.msra.mxu0 0
    %1380 = vmatprep.subr.bf16.mxu0 0
    %1381 = vmatpush1.bf16.msra.mxu0 0
    %1382 = vmatprep.subr.bf16.mxu0 0
    %1383 = vmatpush1.bf16.msra.mxu0 0
    %1384 = vmatprep.subr.bf16.mxu0 0
    %1385 = vmatpush1.bf16.msra.mxu0 0
    %1386 = vmatprep.mubr.bf16.mxu0 0
    %1387 = vmatmul.mubr.bf16.gmra.mrb[0].mxu0 %v1352
    %v1388 = vpop.f32.mrb[0].mxu0
    %v1389 = vadd.f32 %v1337, %v1388
    %v1390 = vpop.f32.mrb[0].mxu0
    %v1391 = vpop.f32.mrb[0].mxu0
    %v1392 = vadd.f32 %v1337, %v1391
    %v1393 = vpop.f32.mrb[0].mxu0
    %1394 = vdwg.mxu0
    %v1395 = vmax.f32 %v1389, 0.0
    %v1396 = vmax.f32 %v1392, 0.0
    %v1397 = vpack.c.bf16 %v1396, %v1395
    %v1398 = vld [vmem:[#allocation10] sm:$0xf]
    %v1399 = vld [vmem:[#allocation10 + $0x4] sm:$0xf]
    %v1400 = vld [vmem:[#allocation10 + $0x8] sm:$0xf]
    %v1401 = vld [vmem:[#allocation10 + $0xc] sm:$0xf]
    %v1402 = vld [vmem:[#allocation10 + $0x10] sm:$0xf]
    %v1403 = vld [vmem:[#allocation10 + $0x14] sm:$0xf]
    %v1404 = vld [vmem:[#allocation10 + $0x18] sm:$0xf]
    %v1405 = vld [vmem:[#allocation10 + $0x1c] sm:$0xf]
    %v1406 = vld [vmem:[#allocation10 + $0x20] sm:$0xf]
    %v1407 = vld [vmem:[#allocation10 + $0x24] sm:$0xf]
    %v1408 = vld [vmem:[#allocation10 + $0x28] sm:$0xf]
    %v1409 = vld [vmem:[#allocation10 + $0x2c] sm:$0xf]
    %v1410 = vld [vmem:[#allocation10 + $0x30] sm:$0xf]
    %v1411 = vld [vmem:[#allocation10 + $0x34] sm:$0xf]
    %v1412 = vld [vmem:[#allocation10 + $0x38] sm:$0xf]
    %v1413 = vld [vmem:[#allocation10 + $0x3c] sm:$0xf]
    %v1414 = vlaneseq
    %v1415 = vshrl.u32 %v1414, 7
    %v1416 = vsub.s32 0, %v1415
    %v1417 = vrot.slane %v259, %v1416
    %v1434 = vunpack.c.l.b16 %v1398
    %v1435 = vunpack.c.l.b16 %v1399
    %v1436 = vunpack.c.l.b16 %v1400
    %v1437 = vunpack.c.l.b16 %v1401
    %v1438 = vunpack.c.l.b16 %v1402
    %v1439 = vunpack.c.l.b16 %v1403
    %v1440 = vunpack.c.l.b16 %v1404
    %v1441 = vunpack.c.l.b16 %v1405
    %v1442 = vunpack.c.l.b16 %v1406
    %v1443 = vunpack.c.l.b16 %v1407
    %v1444 = vunpack.c.l.b16 %v1408
    %v1445 = vunpack.c.l.b16 %v1409
    %v1446 = vunpack.c.l.b16 %v1410
    %v1447 = vunpack.c.l.b16 %v1411
    %v1448 = vunpack.c.l.b16 %v1412
    %v1449 = vunpack.c.l.b16 %v1413
    %v1450 = vpack.c.b16 %v1435, %v1434
    %v1451 = vpack.c.b16 %v1437, %v1436
    %v1452 = vpack.c.b16 %v1439, %v1438
    %v1453 = vpack.c.b16 %v1441, %v1440
    %v1454 = vpack.c.b16 %v1443, %v1442
    %v1455 = vpack.c.b16 %v1445, %v1444
    %v1456 = vpack.c.b16 %v1447, %v1446
    %v1457 = vpack.c.b16 %v1449, %v1448
    %1466 = vmatprep.subr.bf16.mxu0 0
    %1467 = vmatpush1.bf16.msra.mxu0 %v1450
    %1468 = vmatprep.subr.bf16.mxu0 0
    %1469 = vmatpush1.bf16.msra.mxu0 %v1451
    %1470 = vmatprep.subr.bf16.mxu0 0
    %1471 = vmatpush1.bf16.msra.mxu0 %v1452
    %1472 = vmatprep.subr.bf16.mxu0 0
    %1473 = vmatpush1.bf16.msra.mxu0 %v1453
    %1474 = vmatprep.subr.bf16.mxu0 0
    %1475 = vmatpush1.bf16.msra.mxu0 %v1454
    %1476 = vmatprep.subr.bf16.mxu0 0
    %1477 = vmatpush1.bf16.msra.mxu0 %v1455
    %1478 = vmatprep.subr.bf16.mxu0 0
    %1479 = vmatpush1.bf16.msra.mxu0 %v1456
    %1480 = vmatprep.subr.bf16.mxu0 0
    %1481 = vmatpush1.bf16.msra.mxu0 %v1457
    %1482 = vmatprep.subr.bf16.mxu0 0
    %1483 = vmatpush1.bf16.msra.mxu0 0
    %1484 = vmatprep.subr.bf16.mxu0 0
    %1485 = vmatpush1.bf16.msra.mxu0 0
    %1486 = vmatprep.subr.bf16.mxu0 0
    %1487 = vmatpush1.bf16.msra.mxu0 0
    %1488 = vmatprep.subr.bf16.mxu0 0
    %1489 = vmatpush1.bf16.msra.mxu0 0
    %1490 = vmatprep.subr.bf16.mxu0 0
    %1491 = vmatpush1.bf16.msra.mxu0 0
    %1492 = vmatprep.subr.bf16.mxu0 0
    %1493 = vmatpush1.bf16.msra.mxu0 0
    %1494 = vmatprep.subr.bf16.mxu0 0
    %1495 = vmatpush1.bf16.msra.mxu0 0
    %1496 = vmatprep.subr.bf16.mxu0 0
    %1497 = vmatpush1.bf16.msra.mxu0 0
    %1498 = vmatprep.mubr.bf16.mxu0 0
    %1499 = vmatmul.mubr.bf16.gmra.mrb[0].mxu0 %v1397
    %v1500 = vpop.f32.mrb[0].mxu0
    %v1501 = vadd.f32 %v1417, %v1500
    %v1502 = vpop.f32.mrb[0].mxu0
    %v1503 = vpop.f32.mrb[0].mxu0
    %v1504 = vadd.f32 %v1417, %v1503
    %v1505 = vpop.f32.mrb[0].mxu0
    %1506 = vdwg.mxu0
    %v1507 = vadd.f32 %v1501, %v1325
    %v1508 = vadd.f32 %v1504, %v1326
    %v1509 = vsel %vm168, %v1507, 0.0
    %1510 = vadd.xlane.f32.xlu0 %v1509
    %v1511 = vpop.xlane.xlu0 %1510
    %v1512 = vsel %vm168, %v1508, 0.0
    %1513 = vadd.xlane.f32.xlu0 %v1512
    %v1514 = vpop.xlane.xlu0 %1513
    %v1515 = vmul.f32 %v1511, %v1294
    %v1516 = vmul.f32 %v1514, %v1294
    %v1517 = vsub.f32 %v1507, %v1515
    %v1518 = vsub.f32 %v1508, %v1516
    %v1519 = vmul.f32 %v1517, %v1517
    %v1520 = vmul.f32 %v1518, %v1518
    %v1521 = vsel %vm168, %v1519, 0.0
    %1522 = vadd.xlane.f32.xlu0 %v1521
    %v1523 = vpop.xlane.xlu0 %1522
    %v1524 = vsel %vm168, %v1520, 0.0
    %1525 = vadd.xlane.f32.xlu0 %v1524
    %v1526 = vpop.xlane.xlu0 %1525
    %v1527 = vmul.f32 %v1523, %v1294
    %v1528 = vmul.f32 %v1526, %v1294
    %v1529 = vadd.f32 %v1527, 1e-05
    %v1530 = vadd.f32 %v1528, 1e-05
    %v1531 = vrsqrt.pop %v1529
    %v1532 = vrsqrt.pop %v1530
    %v1533 = vmul.f32 %v1517, %v1531
    %v1534 = vmul.f32 %v1518, %v1532
    %v1535 = vlaneseq
    %v1536 = vshrl.u32 %v1535, 7
    %v1537 = vsub.s32 0, %v1536
    %v1538 = vrot.slane %v260, %v1537
    %v1539 = vmul.f32 %v1533, %v1538
    %v1540 = vmul.f32 %v1534, %v1538
    %v1541 = vlaneseq
    %v1542 = vshrl.u32 %v1541, 7
    %v1543 = vsub.s32 0, %v1542
    %v1544 = vrot.slane %v261, %v1543
    %v1545 = vadd.f32 %v1539, %v1544
    %v1546 = vadd.f32 %v1540, %v1544
    %v1547 = vpack.c.bf16 %v1546, %v1545
    %v1549 = vunpack.c.l.b16 %v1547
    %v1550 = vunpack.c.h.b16 %v1547
    %v1551 = vpack.c.b16 %v1549, %v1549
    %v1552 = vpack.c.b16 %v1550, %v1550
    %vm1555 = vcmask 257024
    %1556 = vst.msk [vmem:[#allocation14] sm:$0xf] %vm1555, %v1551
    %1557 = vst.msk [vmem:[#allocation14 + $0x4] sm:$0xf] %vm1555, %v1552
    // Predicated region
    $region58: #{tpu_custom_call.1} parent=1 // pred_check
      _
    $region59: #{tpu_custom_call.1} parent=1 // pred_check_branch
      %1559 = sbr.rel (0) target = $region61
    $region60: #{tpu_custom_call.1} parent=1 // pred_region
      %s1561 = ssub.s32 128, 128
      %1562 = vsyncadd [#allocation4], %s1561
      %s1563 = sshll.u32 [#allocation14], 4
      %s1564 = int_to_ptr.vmem [resolvable:$true] %s1563
      %1569 = dma.vmem_to_hbm [thread:$0]  %s1564, 128, %s7, [#allocation4], 64, 64, 4
    $region61: #{tpu_custom_call.1} parent=1 // pred_fallthru
      _
    // Predicated region
    $region62: #{tpu_custom_call.1} parent=1 // pred_check
      _
    $region63: #{tpu_custom_call.1} parent=1 // pred_check_branch
      %1571 = sbr.rel (0) target = $region65
    $region64: #{tpu_custom_call.1} parent=1 // pred_region
      %1572 = dma.done [#allocation4], 128
    $region65: #{tpu_custom_call.1} parent=1 // pred_fallthru
      _
    %1573 = vsyncpa [#allocation3], 1
    %1574 = vsyncpa [#allocation6], 1
    %1575 = vsyncpa [#allocation9], 1
    %1576 = vsyncpa [#allocation12], 1
    %1577 = vsyncpa [#allocation4], 1

</llo_original>
